<compile_context>
chip_gen: v6e
topology: v6e:2x2x1
jax: 0.10.0
libtpu: 0.0.40
codegen_flags: <defaults>
</compile_context>

<pallas_src>
import functools
import math

import jax
import jax.numpy as jnp
from jax.experimental import pallas as pl
from jax.experimental.pallas import tpu as pltpu


def _round_up(v, m):
    return ((v + m - 1) // m) * m


def signal_vae_kernel(
    x_ref, inv_std_ref, nmean_ref,
    w1_ref, b1_ref, w2_ref, b2_ref,
    wms_ref, bms_ref,
    wd1_ref, bd1_ref, wd2_ref, bd2_ref, wd3_ref, bd3_ref,
    recon_ref, musig_ref,
    *, latent_dim, lat_pad,
):
    def linear(a_f32, w_ref, b_ref):
        # bf16 operands on the MXU, f32 accumulation, f32 epilogue.
        return jnp.dot(a_f32.astype(jnp.bfloat16), w_ref[...],
                       preferred_element_type=jnp.float32) + b_ref[...]

    # ---- encoder ----
    # (x - mean) / std  ==  x * inv_std + (-mean * inv_std); constants exact,
    # precomputed in the wrapper (no in-kernel reciprocal needed).
    x_norm = x_ref[...] * inv_std_ref[...] + nmean_ref[...]
    h = jnp.maximum(linear(x_norm, w1_ref, b1_ref), 0.0)
    h = jnp.maximum(linear(h, w2_ref, b2_ref), 0.0)

    # Fused (mu || log_var) projection, packed into one 128-lane-aligned slab.
    pre = linear(h, wms_ref, bms_ref)                       # (tm, ms_cols)
    lane = jax.lax.broadcasted_iota(jnp.int32, pre.shape, 1)
    is_sigma = (lane >= latent_dim) & (lane < 2 * latent_dim)
    musig = jnp.where(is_sigma, jnp.exp(0.5 * pre), pre)    # [mu | sigma | 0]
    musig_ref[...] = musig                                   # lane-dense store

    # ---- decoder (eval mode: z = mu) ----
    # Columns [latent_dim, lat_pad) of z hit zero rows of wd1 -> no effect.
    # TODO(synk): training-mode reparameterization (mu + randn * sigma) not
    #             fused; would use pltpu.prng_seed / pltpu.prng_random_bits.
    z = musig[:, :lat_pad]
    d = jnp.maximum(linear(z, wd1_ref, bd1_ref), 0.0)
    d = jnp.maximum(linear(d, wd2_ref, bd2_ref), 0.0)
    recon_ref[...] = jax.nn.sigmoid(linear(d, wd3_ref, bd3_ref))


def signal_vae_forward(x_nchw, params, mean, std, *, block_m=1024):
    """x_nchw: (N, C, H, W) float32. Returns (recon_nchw, mu, sigma)."""
    N = x_nchw.shape[0]
    shape = x_nchw.shape[1:]
    in_dim = int(math.prod(shape))

    (w1, b1, w2, b2, wmu, bmu, wsig, bsig,
     wd1, bd1, wd2, bd2, wd3, bd3) = params
    hidden_dim = w1.shape[1]
    latent_dim = wmu.shape[1]

    in_pad = _round_up(in_dim, 128)
    hid_pad = _round_up(hidden_dim, 128)
    lat_pad = _round_up(latent_dim, 128)
    ms_cols = _round_up(2 * latent_dim, 128)     # packed mu|sigma lane width

    # ---- padded weights (pre-cast bf16: halves resident-weight DMA bytes) ----
    def pad_w(w, rows, cols):
        return (jnp.zeros((rows, cols), jnp.bfloat16)
                .at[:w.shape[0], :w.shape[1]].set(w.astype(jnp.bfloat16)))

    def pad_b(b, cols):
        return (jnp.zeros((1, cols), jnp.float32)
                .at[:, :b.shape[-1]].set(b.reshape(1, -1).astype(jnp.float32)))

    # Fuse mu/log_var projections BEFORE padding -> single 128-lane block.
    wms_raw = jnp.concatenate([wmu, wsig], axis=1)
    bms_raw = jnp.concatenate([bmu.reshape(1, -1), bsig.reshape(1, -1)], axis=1)

    w1p, b1p = pad_w(w1, in_pad, hid_pad), pad_b(b1, hid_pad)
    w2p, b2p = pad_w(w2, hid_pad, hid_pad), pad_b(b2, hid_pad)
    wmsp, bmsp = pad_w(wms_raw, hid_pad, ms_cols), pad_b(bms_raw, ms_cols)
    wd1p, bd1p = pad_w(wd1, lat_pad, hid_pad), pad_b(bd1, hid_pad)
    wd2p, bd2p = pad_w(wd2, hid_pad, hid_pad), pad_b(bd2, hid_pad)
    wd3p, bd3p = pad_w(wd3, hid_pad, in_pad), pad_b(bd3, in_pad)

    # Exact normalization constants: x_norm = x * inv_std + (-mean * inv_std).
    inv_std = 1.0 / std.reshape(1, in_dim).astype(jnp.float32)
    nmean = -mean.reshape(1, in_dim).astype(jnp.float32) * inv_std
    inv_std_p = jnp.zeros((1, in_pad), jnp.float32).at[:, :in_dim].set(inv_std)
    nmean_p = jnp.zeros((1, in_pad), jnp.float32).at[:, :in_dim].set(nmean)

    resident = (inv_std_p, nmean_p,
                w1p, b1p, w2p, b2p, wmsp, bmsp,
                wd1p, bd1p, wd2p, bd2p, wd3p, bd3p)
    weight_bytes = sum(int(a.size) * a.dtype.itemsize for a in resident)

    # ---- batch tile: big tiles amortize the ~0.35us/step overhead; keep a
    # double-buffered-IO budget for v5e's 16 MiB default scoped VMEM; force
    # >= 2 grid steps (when N > 8) so both v7x TensorCores get work. ----
    n8 = _round_up(max(N, 1), 8)
    io_row_bytes = 4 * (2 * in_pad + ms_cols)            # x + recon + musig
    tile_budget = 8 << 20                                 # for 2x-buffered IO
    tm_cap = max(8, (tile_budget // (2 * io_row_bytes)) // 8 * 8)
    tm = max(8, min(block_m, n8, tm_cap))
    if _round_up(N, tm) // tm < 2 and n8 >= 16:
        tm = _round_up((n8 + 1) // 2, 8)
    n_pad = _round_up(N, tm)
    grid_m = n_pad // tm

    # ---- x: only materialize a padded copy when actually needed ----
    x_flat = x_nchw.reshape(N, in_dim).astype(jnp.float32)
    if in_pad != in_dim or n_pad != N:
        x_p = jnp.zeros((n_pad, in_pad), jnp.float32).at[:N, :in_dim].set(x_flat)
    else:
        x_p = x_flat

    inputs = (x_p,) + resident

    def batch_spec(cols):
        return pl.BlockSpec((tm, cols), lambda i: (i, 0))

    def resident_spec(arr):
        # full-array block, constant index -> stays VMEM-resident across grid
        return pl.BlockSpec(arr.shape, lambda i: (0, 0))

    in_specs = [batch_spec(in_pad)] + [resident_spec(a) for a in resident]
    out_specs = [batch_spec(in_pad), batch_spec(ms_cols)]
    out_shape = (
        jax.ShapeDtypeStruct((n_pad, in_pad), jnp.float32),    # recon (flat)
        jax.ShapeDtypeStruct((n_pad, ms_cols), jnp.float32),   # [mu | sigma]
    )

    flops = 2 * n_pad * (in_pad * hid_pad + hid_pad * hid_pad
                         + hid_pad * ms_cols + lat_pad * hid_pad
                         + hid_pad * hid_pad + hid_pad * in_pad)
    bytes_accessed = (sum(int(a.size) * a.dtype.itemsize for a in inputs)
                      + sum(int(math.prod(s.shape)) * 4 for s in out_shape))
    cost = pl.CostEstimate(flops=flops,
                           transcendentals=n_pad * (ms_cols + in_pad),
                           bytes_accessed=bytes_accessed)

    # Only raise the scoped-VMEM limit when the estimated footprint needs it
    # (stays within v7x's 64 MiB physical VMEM).
    est_vmem = 2 * tm * io_row_bytes + 2 * weight_bytes + (4 << 20)
    vmem_limit = (min(_round_up(est_vmem, 1 << 20), 60 << 20)
                  if est_vmem > (16 << 20) else None)

    recon_p, musig_p = pl.pallas_call(
        functools.partial(signal_vae_kernel,
                          latent_dim=latent_dim, lat_pad=lat_pad),
        out_shape=out_shape,
        grid_spec=pltpu.PrefetchScalarGridSpec(
            num_scalar_prefetch=0,
            grid=(grid_m,),
            in_specs=in_specs,
            out_specs=out_specs,
        ),
        compiler_params=pltpu.CompilerParams(
            dimension_semantics=("parallel",),
            vmem_limit_bytes=vmem_limit),
        cost_estimate=cost,
    )(*inputs)

    if in_pad != in_dim or n_pad != N:
        recon = recon_p[:N, :in_dim].reshape(N, *shape)
    else:
        recon = recon_p.reshape(N, *shape)
    mu = musig_p[:N, :latent_dim]
    sigma = musig_p[:N, latent_dim:2 * latent_dim]
    return recon, mu, sigma


def init_linear(key, fan_in, fan_out):
    """PyTorch-style uniform(-1/sqrt(fan_in), 1/sqrt(fan_in)).
    Returns W with shape (in, out) (pre-transposed) and bias (1, out)."""
    kw, kb = jax.random.split(key)
    bound = 1.0 / math.sqrt(fan_in)
    w = jax.random.uniform(kw, (fan_in, fan_out), jnp.float32, -bound, bound)
    b = jax.random.uniform(kb, (1, fan_out), jnp.float32, -bound, bound)
    return w, b


if __name__ == "__main__":
    # Small, shape-consistent configuration (exercises lane padding, the packed
    # mu|sigma slab, and the forced 2-step parallel grid).
    N = 64
    shape = (1, 16, 16)              # (C, H, W)
    in_dim = int(math.prod(shape))   # 256
    latent_dim = 32
    hidden_dim = 64

    key = jax.random.PRNGKey(0)
    keys = jax.random.split(key, 8)

    # Encoder params
    w1, b1 = init_linear(keys[0], in_dim, hidden_dim)
    w2, b2 = init_linear(keys[1], hidden_dim, hidden_dim)
    wmu, bmu = init_linear(keys[2], hidden_dim, latent_dim)
    wsig, bsig = init_linear(keys[3], hidden_dim, latent_dim)
    # Decoder params
    wd1, bd1 = init_linear(keys[4], latent_dim, hidden_dim)
    wd2, bd2 = init_linear(keys[5], hidden_dim, hidden_dim)
    wd3, bd3 = init_linear(keys[6], hidden_dim, in_dim)

    params = (w1, b1, w2, b2, wmu, bmu, wsig, bsig,
              wd1, bd1, wd2, bd2, wd3, bd3)

    # Buffers: mean=zeros(shape), std=ones(shape) (module defaults)
    mean = jnp.zeros(shape, jnp.float32)
    std = jnp.ones(shape, jnp.float32)

    x = jax.random.normal(keys[7], (N, *shape), jnp.float32)

    recon, mu, sigma = signal_vae_forward(x, params, mean, std)
    jax.block_until_ready((recon, mu, sigma))

    # Plain-JAX f32 reference (kernel uses bf16 matmul operands -> loose tol).
    x_flat = x.reshape(N, in_dim)
    xn = (x_flat - mean.reshape(1, in_dim)) / std.reshape(1, in_dim)
    h = jnp.maximum(xn @ w1 + b1, 0.0)
    h = jnp.maximum(h @ w2 + b2, 0.0)
    mu_ref = h @ wmu + bmu
    sigma_ref = jnp.exp(0.5 * (h @ wsig + bsig))
    d = jnp.maximum(mu_ref @ wd1 + bd1, 0.0)
    d = jnp.maximum(d @ wd2 + bd2, 0.0)
    recon_ref = jax.nn.sigmoid(d @ wd3 + bd3).reshape(N, *shape)

    assert recon.shape == (N, *shape)
    assert mu.shape == (N, latent_dim) and sigma.shape == (N, latent_dim)
    assert jnp.allclose(recon, recon_ref, atol=5e-2, rtol=5e-2)
    assert jnp.allclose(mu, mu_ref, atol=5e-2, rtol=5e-2)
    assert jnp.allclose(sigma, sigma_ref, atol=5e-2, rtol=5e-2)

    print("KERNEL_OK")
</pallas_src>

<mosaic_0001>
module attributes {stable_mosaic.version = 11 : i64} {
  func.func @signal_vae_kernel(%arg0: i32, %arg1: memref<32x256xf32, #tpu.memory_space<vmem>>, %arg2: memref<1x256xf32, #tpu.memory_space<vmem>>, %arg3: memref<1x256xf32, #tpu.memory_space<vmem>>, %arg4: memref<256x128xbf16, #tpu.memory_space<vmem>>, %arg5: memref<1x128xf32, #tpu.memory_space<vmem>>, %arg6: memref<128x128xbf16, #tpu.memory_space<vmem>>, %arg7: memref<1x128xf32, #tpu.memory_space<vmem>>, %arg8: memref<128x128xbf16, #tpu.memory_space<vmem>>, %arg9: memref<1x128xf32, #tpu.memory_space<vmem>>, %arg10: memref<128x128xbf16, #tpu.memory_space<vmem>>, %arg11: memref<1x128xf32, #tpu.memory_space<vmem>>, %arg12: memref<128x128xbf16, #tpu.memory_space<vmem>>, %arg13: memref<1x128xf32, #tpu.memory_space<vmem>>, %arg14: memref<128x256xbf16, #tpu.memory_space<vmem>>, %arg15: memref<1x256xf32, #tpu.memory_space<vmem>>, %arg16: memref<32x256xf32, #tpu.memory_space<vmem>>, %arg17: memref<32x128xf32, #tpu.memory_space<vmem>>) attributes {dimension_semantics = [#tpu.dimension_semantics<parallel>], iteration_bounds = array<i64: 2>, scalar_prefetch = 0 : i64, scratch_operands = 0 : i64, tpu.core_type = #tpu.core_type<tc>, window_params = [{transform_indices = @transform_0, window_bounds = array<i64: 32, 256>}, {pipeline_mode = #tpu.pipeline_mode<synchronous>, transform_indices = @transform_1, window_bounds = array<i64: 1, 256>}, {pipeline_mode = #tpu.pipeline_mode<synchronous>, transform_indices = @transform_2, window_bounds = array<i64: 1, 256>}, {pipeline_mode = #tpu.pipeline_mode<synchronous>, transform_indices = @transform_3, window_bounds = array<i64: 256, 128>}, {pipeline_mode = #tpu.pipeline_mode<synchronous>, transform_indices = @transform_4, window_bounds = array<i64: 1, 128>}, {pipeline_mode = #tpu.pipeline_mode<synchronous>, transform_indices = @transform_5, window_bounds = array<i64: 128, 128>}, {pipeline_mode = #tpu.pipeline_mode<synchronous>, transform_indices = @transform_6, window_bounds = array<i64: 1, 128>}, {pipeline_mode = #tpu.pipeline_mode<synchronous>, transform_indices = @transform_7, window_bounds = array<i64: 128, 128>}, {pipeline_mode = #tpu.pipeline_mode<synchronous>, transform_indices = @transform_8, window_bounds = array<i64: 1, 128>}, {pipeline_mode = #tpu.pipeline_mode<synchronous>, transform_indices = @transform_9, window_bounds = array<i64: 128, 128>}, {pipeline_mode = #tpu.pipeline_mode<synchronous>, transform_indices = @transform_10, window_bounds = array<i64: 1, 128>}, {pipeline_mode = #tpu.pipeline_mode<synchronous>, transform_indices = @transform_11, window_bounds = array<i64: 128, 128>}, {pipeline_mode = #tpu.pipeline_mode<synchronous>, transform_indices = @transform_12, window_bounds = array<i64: 1, 128>}, {pipeline_mode = #tpu.pipeline_mode<synchronous>, transform_indices = @transform_13, window_bounds = array<i64: 128, 256>}, {pipeline_mode = #tpu.pipeline_mode<synchronous>, transform_indices = @transform_14, window_bounds = array<i64: 1, 256>}, {transform_indices = @transform_15, window_bounds = array<i64: 32, 256>}, {transform_indices = @transform_16, window_bounds = array<i64: 32, 128>}]} {
    %c0 = arith.constant 0 : index
    %c0_0 = arith.constant 0 : index
    %0 = vector.load %arg1[%c0, %c0_0] : memref<32x256xf32, #tpu.memory_space<vmem>>, vector<32x256xf32>
    %c0_1 = arith.constant 0 : index
    %c0_2 = arith.constant 0 : index
    %1 = vector.load %arg2[%c0_1, %c0_2] : memref<1x256xf32, #tpu.memory_space<vmem>>, vector<1x256xf32>
    %2 = vector.broadcast %1 : vector<1x256xf32> to vector<32x256xf32>
    %3 = arith.mulf %0, %2 : vector<32x256xf32>
    %c0_3 = arith.constant 0 : index
    %c0_4 = arith.constant 0 : index
    %4 = vector.load %arg3[%c0_3, %c0_4] : memref<1x256xf32, #tpu.memory_space<vmem>>, vector<1x256xf32>
    %5 = vector.broadcast %4 : vector<1x256xf32> to vector<32x256xf32>
    %6 = arith.addf %3, %5 : vector<32x256xf32>
    %7 = arith.truncf %6 : vector<32x256xf32> to vector<32x256xbf16>
    %c0_5 = arith.constant 0 : index
    %c0_6 = arith.constant 0 : index
    %8 = vector.load %arg4[%c0_5, %c0_6] : memref<256x128xbf16, #tpu.memory_space<vmem>>, vector<256x128xbf16>
    %cst = arith.constant dense<0.000000e+00> : vector<32x128xf32>
    %9 = tpu.matmul %7, %8, %cst {dimension_numbers = #tpu.dot_dimension_numbers<[1], [0], [0], [1], [0, 0, 1, 1], [], []>} : vector<32x256xbf16>, vector<256x128xbf16>, vector<32x128xf32> -> vector<32x128xf32>
    %c0_7 = arith.constant 0 : index
    %c0_8 = arith.constant 0 : index
    %10 = vector.load %arg5[%c0_7, %c0_8] : memref<1x128xf32, #tpu.memory_space<vmem>>, vector<1x128xf32>
    %11 = vector.broadcast %10 : vector<1x128xf32> to vector<32x128xf32>
    %12 = arith.addf %9, %11 : vector<32x128xf32>
    %cst_9 = arith.constant 0.000000e+00 : f32
    %13 = vector.broadcast %cst_9 : f32 to vector<32x128xf32>
    %14 = arith.maximumf %12, %13 : vector<32x128xf32>
    %15 = arith.truncf %14 : vector<32x128xf32> to vector<32x128xbf16>
    %c0_10 = arith.constant 0 : index
    %c0_11 = arith.constant 0 : index
    %16 = vector.load %arg6[%c0_10, %c0_11] : memref<128x128xbf16, #tpu.memory_space<vmem>>, vector<128x128xbf16>
    %cst_12 = arith.constant dense<0.000000e+00> : vector<32x128xf32>
    %17 = tpu.matmul %15, %16, %cst_12 {dimension_numbers = #tpu.dot_dimension_numbers<[1], [0], [0], [1], [0, 0, 1, 1], [], []>} : vector<32x128xbf16>, vector<128x128xbf16>, vector<32x128xf32> -> vector<32x128xf32>
    %c0_13 = arith.constant 0 : index
    %c0_14 = arith.constant 0 : index
    %18 = vector.load %arg7[%c0_13, %c0_14] : memref<1x128xf32, #tpu.memory_space<vmem>>, vector<1x128xf32>
    %19 = vector.broadcast %18 : vector<1x128xf32> to vector<32x128xf32>
    %20 = arith.addf %17, %19 : vector<32x128xf32>
    %cst_15 = arith.constant 0.000000e+00 : f32
    %21 = vector.broadcast %cst_15 : f32 to vector<32x128xf32>
    %22 = arith.maximumf %20, %21 : vector<32x128xf32>
    %23 = arith.truncf %22 : vector<32x128xf32> to vector<32x128xbf16>
    %c0_16 = arith.constant 0 : index
    %c0_17 = arith.constant 0 : index
    %24 = vector.load %arg8[%c0_16, %c0_17] : memref<128x128xbf16, #tpu.memory_space<vmem>>, vector<128x128xbf16>
    %cst_18 = arith.constant dense<0.000000e+00> : vector<32x128xf32>
    %25 = tpu.matmul %23, %24, %cst_18 {dimension_numbers = #tpu.dot_dimension_numbers<[1], [0], [0], [1], [0, 0, 1, 1], [], []>} : vector<32x128xbf16>, vector<128x128xbf16>, vector<32x128xf32> -> vector<32x128xf32>
    %c0_19 = arith.constant 0 : index
    %c0_20 = arith.constant 0 : index
    %26 = vector.load %arg9[%c0_19, %c0_20] : memref<1x128xf32, #tpu.memory_space<vmem>>, vector<1x128xf32>
    %27 = vector.broadcast %26 : vector<1x128xf32> to vector<32x128xf32>
    %28 = arith.addf %25, %27 : vector<32x128xf32>
    %29 = tpu.iota {dimensions = array<i32: 1>} : vector<32x128xi32>
    %c32_i32 = arith.constant 32 : i32
    %30 = vector.broadcast %c32_i32 : i32 to vector<32x128xi32>
    %31 = arith.cmpi sge, %29, %30 : vector<32x128xi32>
    %c64_i32 = arith.constant 64 : i32
    %32 = vector.broadcast %c64_i32 : i32 to vector<32x128xi32>
    %33 = arith.cmpi slt, %29, %32 : vector<32x128xi32>
    %34 = arith.andi %31, %33 : vector<32x128xi1>
    %cst_21 = arith.constant 5.000000e-01 : f32
    %35 = vector.broadcast %cst_21 : f32 to vector<32x128xf32>
    %36 = arith.mulf %35, %28 : vector<32x128xf32>
    %37 = math.exp %36 : vector<32x128xf32>
    %38 = arith.select %34, %37, %28 : vector<32x128xi1>, vector<32x128xf32>
    %c0_22 = arith.constant 0 : index
    %c0_23 = arith.constant 0 : index
    %39 = vector.load %arg17[%c0_22, %c0_23] : memref<32x128xf32, #tpu.memory_space<vmem>>, vector<32x128xf32>
    tpu.vector_store %arg17[%c0_22, %c0_23], %38 {strides = array<i32>} : memref<32x128xf32, #tpu.memory_space<vmem>>, vector<32x128xf32>,
    %40 = arith.truncf %38 : vector<32x128xf32> to vector<32x128xbf16>
    %c0_24 = arith.constant 0 : index
    %c0_25 = arith.constant 0 : index
    %41 = vector.load %arg10[%c0_24, %c0_25] : memref<128x128xbf16, #tpu.memory_space<vmem>>, vector<128x128xbf16>
    %cst_26 = arith.constant dense<0.000000e+00> : vector<32x128xf32>
    %42 = tpu.matmul %40, %41, %cst_26 {dimension_numbers = #tpu.dot_dimension_numbers<[1], [0], [0], [1], [0, 0, 1, 1], [], []>} : vector<32x128xbf16>, vector<128x128xbf16>, vector<32x128xf32> -> vector<32x128xf32>
    %c0_27 = arith.constant 0 : index
    %c0_28 = arith.constant 0 : index
    %43 = vector.load %arg11[%c0_27, %c0_28] : memref<1x128xf32, #tpu.memory_space<vmem>>, vector<1x128xf32>
    %44 = vector.broadcast %43 : vector<1x128xf32> to vector<32x128xf32>
    %45 = arith.addf %42, %44 : vector<32x128xf32>
    %cst_29 = arith.constant 0.000000e+00 : f32
    %46 = vector.broadcast %cst_29 : f32 to vector<32x128xf32>
    %47 = arith.maximumf %45, %46 : vector<32x128xf32>
    %48 = arith.truncf %47 : vector<32x128xf32> to vector<32x128xbf16>
    %c0_30 = arith.constant 0 : index
    %c0_31 = arith.constant 0 : index
    %49 = vector.load %arg12[%c0_30, %c0_31] : memref<128x128xbf16, #tpu.memory_space<vmem>>, vector<128x128xbf16>
    %cst_32 = arith.constant dense<0.000000e+00> : vector<32x128xf32>
    %50 = tpu.matmul %48, %49, %cst_32 {dimension_numbers = #tpu.dot_dimension_numbers<[1], [0], [0], [1], [0, 0, 1, 1], [], []>} : vector<32x128xbf16>, vector<128x128xbf16>, vector<32x128xf32> -> vector<32x128xf32>
    %c0_33 = arith.constant 0 : index
    %c0_34 = arith.constant 0 : index
    %51 = vector.load %arg13[%c0_33, %c0_34] : memref<1x128xf32, #tpu.memory_space<vmem>>, vector<1x128xf32>
    %52 = vector.broadcast %51 : vector<1x128xf32> to vector<32x128xf32>
    %53 = arith.addf %50, %52 : vector<32x128xf32>
    %cst_35 = arith.constant 0.000000e+00 : f32
    %54 = vector.broadcast %cst_35 : f32 to vector<32x128xf32>
    %55 = arith.maximumf %53, %54 : vector<32x128xf32>
    %56 = arith.truncf %55 : vector<32x128xf32> to vector<32x128xbf16>
    %c0_36 = arith.constant 0 : index
    %c0_37 = arith.constant 0 : index
    %57 = vector.load %arg14[%c0_36, %c0_37] : memref<128x256xbf16, #tpu.memory_space<vmem>>, vector<128x256xbf16>
    %cst_38 = arith.constant dense<0.000000e+00> : vector<32x256xf32>
    %58 = tpu.matmul %56, %57, %cst_38 {dimension_numbers = #tpu.dot_dimension_numbers<[1], [0], [0], [1], [0, 0, 1, 1], [], []>} : vector<32x128xbf16>, vector<128x256xbf16>, vector<32x256xf32> -> vector<32x256xf32>
    %c0_39 = arith.constant 0 : index
    %c0_40 = arith.constant 0 : index
    %59 = vector.load %arg15[%c0_39, %c0_40] : memref<1x256xf32, #tpu.memory_space<vmem>>, vector<1x256xf32>
    %60 = vector.broadcast %59 : vector<1x256xf32> to vector<32x256xf32>
    %61 = arith.addf %58, %60 : vector<32x256xf32>
    %62 = arith.negf %61 : vector<32x256xf32>
    %63 = math.exp %62 : vector<32x256xf32>
    %cst_41 = arith.constant 1.000000e+00 : f32
    %64 = vector.broadcast %cst_41 : f32 to vector<32x256xf32>
    %65 = arith.addf %64, %63 : vector<32x256xf32>
    %66 = arith.divf %64, %65 : vector<32x256xf32>
    %c0_42 = arith.constant 0 : index
    %c0_43 = arith.constant 0 : index
    %67 = vector.load %arg16[%c0_42, %c0_43] : memref<32x256xf32, #tpu.memory_space<vmem>>, vector<32x256xf32>
    tpu.vector_store %arg16[%c0_42, %c0_43], %66 {strides = array<i32>} : memref<32x256xf32, #tpu.memory_space<vmem>>, vector<32x256xf32>,
    return
  }
  func.func @transform_0(%arg0: i32) -> (i32, i32) {
    %c0_i32 = arith.constant 0 : i32
    %c0_i32_0 = arith.constant 0 : i32
    return %arg0, %c0_i32 : i32, i32
  }
  func.func @transform_1(%arg0: i32) -> (i32, i32) {
    %c0_i32 = arith.constant 0 : i32
    %c0_i32_0 = arith.constant 0 : i32
    %c0_i32_1 = arith.constant 0 : i32
    return %c0_i32, %c0_i32_0 : i32, i32
  }
  func.func @transform_2(%arg0: i32) -> (i32, i32) {
    %c0_i32 = arith.constant 0 : i32
    %c0_i32_0 = arith.constant 0 : i32
    %c0_i32_1 = arith.constant 0 : i32
    return %c0_i32, %c0_i32_0 : i32, i32
  }
  func.func @transform_3(%arg0: i32) -> (i32, i32) {
    %c0_i32 = arith.constant 0 : i32
    %c0_i32_0 = arith.constant 0 : i32
    %c0_i32_1 = arith.constant 0 : i32
    return %c0_i32, %c0_i32_0 : i32, i32
  }
  func.func @transform_4(%arg0: i32) -> (i32, i32) {
    %c0_i32 = arith.constant 0 : i32
    %c0_i32_0 = arith.constant 0 : i32
    %c0_i32_1 = arith.constant 0 : i32
    return %c0_i32, %c0_i32_0 : i32, i32
  }
  func.func @transform_5(%arg0: i32) -> (i32, i32) {
    %c0_i32 = arith.constant 0 : i32
    %c0_i32_0 = arith.constant 0 : i32
    %c0_i32_1 = arith.constant 0 : i32
    return %c0_i32, %c0_i32_0 : i32, i32
  }
  func.func @transform_6(%arg0: i32) -> (i32, i32) {
    %c0_i32 = arith.constant 0 : i32
    %c0_i32_0 = arith.constant 0 : i32
    %c0_i32_1 = arith.constant 0 : i32
    return %c0_i32, %c0_i32_0 : i32, i32
  }
  func.func @transform_7(%arg0: i32) -> (i32, i32) {
    %c0_i32 = arith.constant 0 : i32
    %c0_i32_0 = arith.constant 0 : i32
    %c0_i32_1 = arith.constant 0 : i32
    return %c0_i32, %c0_i32_0 : i32, i32
  }
  func.func @transform_8(%arg0: i32) -> (i32, i32) {
    %c0_i32 = arith.constant 0 : i32
    %c0_i32_0 = arith.constant 0 : i32
    %c0_i32_1 = arith.constant 0 : i32
    return %c0_i32, %c0_i32_0 : i32, i32
  }
  func.func @transform_9(%arg0: i32) -> (i32, i32) {
    %c0_i32 = arith.constant 0 : i32
    %c0_i32_0 = arith.constant 0 : i32
    %c0_i32_1 = arith.constant 0 : i32
    return %c0_i32, %c0_i32_0 : i32, i32
  }
  func.func @transform_10(%arg0: i32) -> (i32, i32) {
    %c0_i32 = arith.constant 0 : i32
    %c0_i32_0 = arith.constant 0 : i32
    %c0_i32_1 = arith.constant 0 : i32
    return %c0_i32, %c0_i32_0 : i32, i32
  }
  func.func @transform_11(%arg0: i32) -> (i32, i32) {
    %c0_i32 = arith.constant 0 : i32
    %c0_i32_0 = arith.constant 0 : i32
    %c0_i32_1 = arith.constant 0 : i32
    return %c0_i32, %c0_i32_0 : i32, i32
  }
  func.func @transform_12(%arg0: i32) -> (i32, i32) {
    %c0_i32 = arith.constant 0 : i32
    %c0_i32_0 = arith.constant 0 : i32
    %c0_i32_1 = arith.constant 0 : i32
    return %c0_i32, %c0_i32_0 : i32, i32
  }
  func.func @transform_13(%arg0: i32) -> (i32, i32) {
    %c0_i32 = arith.constant 0 : i32
    %c0_i32_0 = arith.constant 0 : i32
    %c0_i32_1 = arith.constant 0 : i32
    return %c0_i32, %c0_i32_0 : i32, i32
  }
  func.func @transform_14(%arg0: i32) -> (i32, i32) {
    %c0_i32 = arith.constant 0 : i32
    %c0_i32_0 = arith.constant 0 : i32
    %c0_i32_1 = arith.constant 0 : i32
    return %c0_i32, %c0_i32_0 : i32, i32
  }
  func.func @transform_15(%arg0: i32) -> (i32, i32) {
    %c0_i32 = arith.constant 0 : i32
    %c0_i32_0 = arith.constant 0 : i32
    return %arg0, %c0_i32 : i32, i32
  }
  func.func @transform_16(%arg0: i32) -> (i32, i32) {
    %c0_i32 = arith.constant 0 : i32
    %c0_i32_0 = arith.constant 0 : i32
    return %arg0, %c0_i32 : i32, i32
  }
}

</mosaic_0001>

<llo_original>
// kernel: tpu_custom_call.1
$region0: #{tpu_custom_call.1}
  #allocation0 [shape = 'u32[]', space=smem, size = 0x4, offset = 0x4, fixed_abs, tag = 'smem constant byte address 0x4 - core index']
  #allocation1 [shape = 'u32[144,128]{1,0:T(1,128)}', space=vmem, size = 0x12000, scoped, tag = 'internal scratch']
  %s0 = inlined_call_operand.hbm [shape: f32[64,256], index: 0, kind: input, shape index: {}]
  %s1 = inlined_call_operand.hbm [shape: f32[1,256], index: 1, kind: input, shape index: {}]
  %s2 = inlined_call_operand.vmem [shape: f32[1,256], index: 2, kind: input, shape index: {}]
  %s3 = inlined_call_operand.hbm [shape: bf16[256,128], index: 3, kind: input, shape index: {}]
  %s4 = inlined_call_operand.vmem [shape: f32[1,128], index: 4, kind: input, shape index: {}]
  %s5 = inlined_call_operand.hbm [shape: bf16[128,128], index: 5, kind: input, shape index: {}]
  %s6 = inlined_call_operand.vmem [shape: f32[1,128], index: 6, kind: input, shape index: {}]
  %s7 = inlined_call_operand.hbm [shape: bf16[128,128], index: 7, kind: input, shape index: {}]
  %s8 = inlined_call_operand.vmem [shape: f32[1,128], index: 8, kind: input, shape index: {}]
  %s9 = inlined_call_operand.hbm [shape: bf16[128,128], index: 9, kind: input, shape index: {}]
  %s10 = inlined_call_operand.vmem [shape: f32[1,128], index: 10, kind: input, shape index: {}]
  %s11 = inlined_call_operand.hbm [shape: bf16[128,128], index: 11, kind: input, shape index: {}]
  %s12 = inlined_call_operand.vmem [shape: f32[1,128], index: 12, kind: input, shape index: {}]
  %s13 = inlined_call_operand.hbm [shape: bf16[128,256], index: 13, kind: input, shape index: {}]
  %s14 = inlined_call_operand.vmem [shape: f32[1,256], index: 14, kind: input, shape index: {}]
  %s15 = inlined_call_operand.hbm [shape: f32[64,256], index: 15, kind: output, shape index: {0}]
  %s16 = inlined_call_operand.hbm [shape: f32[64,128], index: 16, kind: output, shape index: {1}]
  %17 = xla_tuple %s15, %s16
  %s18 = sld [smem:[#allocation0]]
  $region133: #{tpu_custom_call.1} parent=0
    _
  %s20 = ssub.s32 1, %s18
  %s21 = scalar_select 0, %s20, %s18
  $region1: #{tpu_custom_call.1} parent=0
    #allocation2 [shape = 'u8[65536]{0}', space=vmem, size = 0x10000, scoped, tag = 'input window, operand 0']
    #allocation3 [shape = 's32[2]{0}', space=sflag, size = 0x8, scoped, tag = 'scoped memory for tpu_custom_call.1']
    #allocation4 [shape = 's32[2]{0}', space=sflag, size = 0x8, scoped, tag = 'scoped memory for tpu_custom_call.1']
    #allocation5 [shape = 'u8[1024]{0}', space=vmem, size = 0x400, scoped, tag = 'input window, operand 1, single buffered']
    #allocation6 [shape = 's32[1]{0}', space=sflag, size = 0x4, scoped, tag = 'scoped memory for tpu_custom_call.1']
    #allocation7 [shape = 'u8[65536]{0}', space=vmem, size = 0x10000, scoped, tag = 'input window, operand 3, single buffered']
    #allocation8 [shape = 'u8[32768]{0}', space=vmem, size = 0x8000, scoped, tag = 'input window, operand 5, single buffered']
    #allocation9 [shape = 's32[1]{0}', space=sflag, size = 0x4, scoped, tag = 'scoped memory for tpu_custom_call.1']
    #allocation10 [shape = 'u8[32768]{0}', space=vmem, size = 0x8000, scoped, tag = 'input window, operand 7, single buffered']
    #allocation11 [shape = 'u8[32768]{0}', space=vmem, size = 0x8000, scoped, tag = 'input window, operand 9, single buffered']
    #allocation12 [shape = 's32[1]{0}', space=sflag, size = 0x4, scoped, tag = 'scoped memory for tpu_custom_call.1']
    #allocation13 [shape = 'u8[32768]{0}', space=vmem, size = 0x8000, scoped, tag = 'input window, operand 11, single buffered']
    #allocation14 [shape = 'u8[65536]{0}', space=vmem, size = 0x10000, scoped, tag = 'input window, operand 13, single buffered']
    #allocation15 [shape = 's32[1]{0}', space=sflag, size = 0x4, scoped, tag = 'scoped memory for tpu_custom_call.1']
    #allocation16 [shape = 'u8[65536]{0}', space=vmem, size = 0x10000, scoped, tag = 'output window, operand 0']
    #allocation17 [shape = 'u8[32768]{0}', space=vmem, size = 0x8000, scoped, tag = 'output window, operand 1']
    #allocation18 [shape = 's32[2]{0}', space=sflag, size = 0x8, scoped, tag = 'scoped memory for tpu_custom_call.1']
    %22 = vsyncpa [#allocation3], 0
    %s23 = scalar_lea.sflag [#allocation3], 1
    %24 = vsyncpa %s23, 0
    %25 = vsyncpa [#allocation6], 0
    %26 = vsyncpa [#allocation9], 0
    %27 = vsyncpa [#allocation12], 0
    %28 = vsyncpa [#allocation15], 0
    %29 = vsyncpa [#allocation4], 0
    %s30 = scalar_lea.sflag [#allocation4], 1
    %31 = vsyncpa %s30, 0
    %32 = vsyncpa [#allocation18], 0
    %s33 = scalar_lea.sflag [#allocation18], 1
    %34 = vsyncpa %s33, 0
    loop: start=0, step=1, limit=4
    $region2: #{tpu_custom_call.1} parent=1 // loop_pre_header
      _
    $region3: #{tpu_custom_call.1} parent=1 // loop_header
      %s36 = sphi 0, %s40
      %p37 = scmp.ge.s32.totalorder %s36, 4
      %s46 = sphi 0, %s48
      %s49 = sphi 0, %s46
      %s50 = sphi 0, %s49
      %s66 = sphi 0, %s50
      %s70 = sphi 0, %s70
      %s72 = sphi 0, %s70
      %s73 = sphi 0, %s72
      %s87 = sphi 0, %s73
      %s91 = sphi 0, %s91
      %s93 = sphi 0, %s91
      %s94 = sphi 0, %s93
      %s108 = sphi 0, %s94
      %s112 = sphi 0, %s112
      %s114 = sphi 0, %s112
      %s115 = sphi 0, %s114
      %s129 = sphi 0, %s115
      %s133 = sphi 0, %s133
      %s135 = sphi 0, %s133
      %s136 = sphi 0, %s135
      %s150 = sphi 0, %s136
      %s154 = sphi 0, %s154
      %s156 = sphi 0, %s154
      %s157 = sphi 0, %s156
      %s171 = sphi 0, %s157
      %s175 = sphi 0, %s175
      %s177 = sphi 0, %s175
      %s178 = sphi 0, %s177
      %s192 = sphi 0, %s178
      %s196 = sphi 0, %s196
      %s198 = sphi 0, %s196
      %s199 = sphi 0, %s198
      %s213 = sphi 0, %s199
      %s217 = sphi 0, %s217
      %s219 = sphi 0, %s217
      %s220 = sphi 0, %s219
      %s234 = sphi 0, %s220
      %s238 = sphi 0, %s238
      %s240 = sphi 0, %s238
      %s241 = sphi 0, %s240
      %s255 = sphi 0, %s241
      %s259 = sphi 0, %s259
      %s261 = sphi 0, %s259
      %s262 = sphi 0, %s261
      %s276 = sphi 0, %s262
      %s280 = sphi 0, %s280
      %s282 = sphi 0, %s280
      %s283 = sphi 0, %s282
      %s297 = sphi 0, %s283
      %s301 = sphi 0, %s301
      %s303 = sphi 0, %s301
      %s304 = sphi 0, %s303
      %s318 = sphi 0, %s304
      %s322 = sphi 0, %s322
      %s324 = sphi 0, %s322
      %s325 = sphi 0, %s324
      %s339 = sphi 0, %s325
      %s343 = sphi 0, %s343
      %s345 = sphi 0, %s343
      %s346 = sphi 0, %s345
      %s360 = sphi 0, %s346
      %s366 = sphi 0, %s368
      %s369 = sphi 0, %s366
      %s370 = sphi 0, %s369
      %s386 = sphi 0, %s370
      %s392 = sphi 0, %s394
      %s395 = sphi 0, %s392
      %s396 = sphi 0, %s395
      %s412 = sphi 0, %s396
    $region4: #{tpu_custom_call.1} parent=1 // loop_header_branch
      %39 = sbr.rel (%p37) target = $region8
    $region5: #{tpu_custom_call.1} parent=1 // loop_body
      %s41 = ssub.s32 %s36, 1
      %s42 = ssub.s32 %s36, 2
      %s43 = sadd.s32 %s36, 1
      %s44 = ssub.s32 %s36, %s43
      %p45 = scmp.eq.s32.totalorder %s44, 0
      %s47 = sadd.s32 %s46, 1
      %s48 = scalar_select %p45, %s46, %s47
      %p51 = pneg %p45
      %p52 = scmp.eq.s32.totalorder %s36, 1
      %p53 = por %p51, %p52
      %p54 = scmp.ne.s32.totalorder %s46, %s49
      %p55 = scmp.eq.s32.totalorder %s36, 0
      %p56 = por %p54, %p55
      %p57 = scmp.ne.s32.totalorder %s46, %s49
      %p58 = scmp.eq.s32.totalorder %s41, 1
      %p59 = por %p57, %p58
      %p60 = scmp.ne.s32.totalorder %s49, %s50
      %p61 = scmp.eq.s32.totalorder %s41, 0
      %p62 = por %p60, %p61
      %p63 = scmp.ne.s32.totalorder %s49, %s50
      %p64 = scmp.eq.s32.totalorder %s42, 1
      %p65 = por %p63, %p64
      %p67 = scmp.ne.s32.totalorder %s50, %s66
      %p68 = scmp.eq.s32.totalorder %s42, 0
      %p69 = por %p67, %p68
      %s71 = sadd.s32 %s70, 1
      %p74 = scmp.eq.s32.totalorder %s36, 1
      %p75 = scmp.ne.s32.totalorder %s70, %s72
      %p76 = scmp.eq.s32.totalorder %s36, 0
      %p77 = por %p75, %p76
      %p78 = scmp.ne.s32.totalorder %s70, %s72
      %p79 = scmp.eq.s32.totalorder %s41, 1
      %p80 = por %p78, %p79
      %p81 = scmp.ne.s32.totalorder %s72, %s73
      %p82 = scmp.eq.s32.totalorder %s41, 0
      %p83 = por %p81, %p82
      %p84 = scmp.ne.s32.totalorder %s72, %s73
      %p85 = scmp.eq.s32.totalorder %s42, 1
      %p86 = por %p84, %p85
      %p88 = scmp.ne.s32.totalorder %s73, %s87
      %p89 = scmp.eq.s32.totalorder %s42, 0
      %p90 = por %p88, %p89
      %s92 = sadd.s32 %s91, 1
      %p95 = scmp.eq.s32.totalorder %s36, 1
      %p96 = scmp.ne.s32.totalorder %s91, %s93
      %p97 = scmp.eq.s32.totalorder %s36, 0
      %p98 = por %p96, %p97
      %p99 = scmp.ne.s32.totalorder %s91, %s93
      %p100 = scmp.eq.s32.totalorder %s41, 1
      %p101 = por %p99, %p100
      %p102 = scmp.ne.s32.totalorder %s93, %s94
      %p103 = scmp.eq.s32.totalorder %s41, 0
      %p104 = por %p102, %p103
      %p105 = scmp.ne.s32.totalorder %s93, %s94
      %p106 = scmp.eq.s32.totalorder %s42, 1
      %p107 = por %p105, %p106
      %p109 = scmp.ne.s32.totalorder %s94, %s108
      %p110 = scmp.eq.s32.totalorder %s42, 0
      %p111 = por %p109, %p110
      %s113 = sadd.s32 %s112, 1
      %p116 = scmp.eq.s32.totalorder %s36, 1
      %p117 = scmp.ne.s32.totalorder %s112, %s114
      %p118 = scmp.eq.s32.totalorder %s36, 0
      %p119 = por %p117, %p118
      %p120 = scmp.ne.s32.totalorder %s112, %s114
      %p121 = scmp.eq.s32.totalorder %s41, 1
      %p122 = por %p120, %p121
      %p123 = scmp.ne.s32.totalorder %s114, %s115
      %p124 = scmp.eq.s32.totalorder %s41, 0
      %p125 = por %p123, %p124
      %p126 = scmp.ne.s32.totalorder %s114, %s115
      %p127 = scmp.eq.s32.totalorder %s42, 1
      %p128 = por %p126, %p127
      %p130 = scmp.ne.s32.totalorder %s115, %s129
      %p131 = scmp.eq.s32.totalorder %s42, 0
      %p132 = por %p130, %p131
      %s134 = sadd.s32 %s133, 1
      %p137 = scmp.eq.s32.totalorder %s36, 1
      %p138 = scmp.ne.s32.totalorder %s133, %s135
      %p139 = scmp.eq.s32.totalorder %s36, 0
      %p140 = por %p138, %p139
      %p141 = scmp.ne.s32.totalorder %s133, %s135
      %p142 = scmp.eq.s32.totalorder %s41, 1
      %p143 = por %p141, %p142
      %p144 = scmp.ne.s32.totalorder %s135, %s136
      %p145 = scmp.eq.s32.totalorder %s41, 0
      %p146 = por %p144, %p145
      %p147 = scmp.ne.s32.totalorder %s135, %s136
      %p148 = scmp.eq.s32.totalorder %s42, 1
      %p149 = por %p147, %p148
      %p151 = scmp.ne.s32.totalorder %s136, %s150
      %p152 = scmp.eq.s32.totalorder %s42, 0
      %p153 = por %p151, %p152
      %s155 = sadd.s32 %s154, 1
      %p158 = scmp.eq.s32.totalorder %s36, 1
      %p159 = scmp.ne.s32.totalorder %s154, %s156
      %p160 = scmp.eq.s32.totalorder %s36, 0
      %p161 = por %p159, %p160
      %p162 = scmp.ne.s32.totalorder %s154, %s156
      %p163 = scmp.eq.s32.totalorder %s41, 1
      %p164 = por %p162, %p163
      %p165 = scmp.ne.s32.totalorder %s156, %s157
      %p166 = scmp.eq.s32.totalorder %s41, 0
      %p167 = por %p165, %p166
      %p168 = scmp.ne.s32.totalorder %s156, %s157
      %p169 = scmp.eq.s32.totalorder %s42, 1
      %p170 = por %p168, %p169
      %p172 = scmp.ne.s32.totalorder %s157, %s171
      %p173 = scmp.eq.s32.totalorder %s42, 0
      %p174 = por %p172, %p173
      %s176 = sadd.s32 %s175, 1
      %p179 = scmp.eq.s32.totalorder %s36, 1
      %p180 = scmp.ne.s32.totalorder %s175, %s177
      %p181 = scmp.eq.s32.totalorder %s36, 0
      %p182 = por %p180, %p181
      %p183 = scmp.ne.s32.totalorder %s175, %s177
      %p184 = scmp.eq.s32.totalorder %s41, 1
      %p185 = por %p183, %p184
      %p186 = scmp.ne.s32.totalorder %s177, %s178
      %p187 = scmp.eq.s32.totalorder %s41, 0
      %p188 = por %p186, %p187
      %p189 = scmp.ne.s32.totalorder %s177, %s178
      %p190 = scmp.eq.s32.totalorder %s42, 1
      %p191 = por %p189, %p190
      %p193 = scmp.ne.s32.totalorder %s178, %s192
      %p194 = scmp.eq.s32.totalorder %s42, 0
      %p195 = por %p193, %p194
      %s197 = sadd.s32 %s196, 1
      %p200 = scmp.eq.s32.totalorder %s36, 1
      %p201 = scmp.ne.s32.totalorder %s196, %s198
      %p202 = scmp.eq.s32.totalorder %s36, 0
      %p203 = por %p201, %p202
      %p204 = scmp.ne.s32.totalorder %s196, %s198
      %p205 = scmp.eq.s32.totalorder %s41, 1
      %p206 = por %p204, %p205
      %p207 = scmp.ne.s32.totalorder %s198, %s199
      %p208 = scmp.eq.s32.totalorder %s41, 0
      %p209 = por %p207, %p208
      %p210 = scmp.ne.s32.totalorder %s198, %s199
      %p211 = scmp.eq.s32.totalorder %s42, 1
      %p212 = por %p210, %p211
      %p214 = scmp.ne.s32.totalorder %s199, %s213
      %p215 = scmp.eq.s32.totalorder %s42, 0
      %p216 = por %p214, %p215
      %s218 = sadd.s32 %s217, 1
      %p221 = scmp.eq.s32.totalorder %s36, 1
      %p222 = scmp.ne.s32.totalorder %s217, %s219
      %p223 = scmp.eq.s32.totalorder %s36, 0
      %p224 = por %p222, %p223
      %p225 = scmp.ne.s32.totalorder %s217, %s219
      %p226 = scmp.eq.s32.totalorder %s41, 1
      %p227 = por %p225, %p226
      %p228 = scmp.ne.s32.totalorder %s219, %s220
      %p229 = scmp.eq.s32.totalorder %s41, 0
      %p230 = por %p228, %p229
      %p231 = scmp.ne.s32.totalorder %s219, %s220
      %p232 = scmp.eq.s32.totalorder %s42, 1
      %p233 = por %p231, %p232
      %p235 = scmp.ne.s32.totalorder %s220, %s234
      %p236 = scmp.eq.s32.totalorder %s42, 0
      %p237 = por %p235, %p236
      %s239 = sadd.s32 %s238, 1
      %p242 = scmp.eq.s32.totalorder %s36, 1
      %p243 = scmp.ne.s32.totalorder %s238, %s240
      %p244 = scmp.eq.s32.totalorder %s36, 0
      %p245 = por %p243, %p244
      %p246 = scmp.ne.s32.totalorder %s238, %s240
      %p247 = scmp.eq.s32.totalorder %s41, 1
      %p248 = por %p246, %p247
      %p249 = scmp.ne.s32.totalorder %s240, %s241
      %p250 = scmp.eq.s32.totalorder %s41, 0
      %p251 = por %p249, %p250
      %p252 = scmp.ne.s32.totalorder %s240, %s241
      %p253 = scmp.eq.s32.totalorder %s42, 1
      %p254 = por %p252, %p253
      %p256 = scmp.ne.s32.totalorder %s241, %s255
      %p257 = scmp.eq.s32.totalorder %s42, 0
      %p258 = por %p256, %p257
      %s260 = sadd.s32 %s259, 1
      %p263 = scmp.eq.s32.totalorder %s36, 1
      %p264 = scmp.ne.s32.totalorder %s259, %s261
      %p265 = scmp.eq.s32.totalorder %s36, 0
      %p266 = por %p264, %p265
      %p267 = scmp.ne.s32.totalorder %s259, %s261
      %p268 = scmp.eq.s32.totalorder %s41, 1
      %p269 = por %p267, %p268
      %p270 = scmp.ne.s32.totalorder %s261, %s262
      %p271 = scmp.eq.s32.totalorder %s41, 0
      %p272 = por %p270, %p271
      %p273 = scmp.ne.s32.totalorder %s261, %s262
      %p274 = scmp.eq.s32.totalorder %s42, 1
      %p275 = por %p273, %p274
      %p277 = scmp.ne.s32.totalorder %s262, %s276
      %p278 = scmp.eq.s32.totalorder %s42, 0
      %p279 = por %p277, %p278
      %s281 = sadd.s32 %s280, 1
      %p284 = scmp.eq.s32.totalorder %s36, 1
      %p285 = scmp.ne.s32.totalorder %s280, %s282
      %p286 = scmp.eq.s32.totalorder %s36, 0
      %p287 = por %p285, %p286
      %p288 = scmp.ne.s32.totalorder %s280, %s282
      %p289 = scmp.eq.s32.totalorder %s41, 1
      %p290 = por %p288, %p289
      %p291 = scmp.ne.s32.totalorder %s282, %s283
      %p292 = scmp.eq.s32.totalorder %s41, 0
      %p293 = por %p291, %p292
      %p294 = scmp.ne.s32.totalorder %s282, %s283
      %p295 = scmp.eq.s32.totalorder %s42, 1
      %p296 = por %p294, %p295
      %p298 = scmp.ne.s32.totalorder %s283, %s297
      %p299 = scmp.eq.s32.totalorder %s42, 0
      %p300 = por %p298, %p299
      %s302 = sadd.s32 %s301, 1
      %p305 = scmp.eq.s32.totalorder %s36, 1
      %p306 = scmp.ne.s32.totalorder %s301, %s303
      %p307 = scmp.eq.s32.totalorder %s36, 0
      %p308 = por %p306, %p307
      %p309 = scmp.ne.s32.totalorder %s301, %s303
      %p310 = scmp.eq.s32.totalorder %s41, 1
      %p311 = por %p309, %p310
      %p312 = scmp.ne.s32.totalorder %s303, %s304
      %p313 = scmp.eq.s32.totalorder %s41, 0
      %p314 = por %p312, %p313
      %p315 = scmp.ne.s32.totalorder %s303, %s304
      %p316 = scmp.eq.s32.totalorder %s42, 1
      %p317 = por %p315, %p316
      %p319 = scmp.ne.s32.totalorder %s304, %s318
      %p320 = scmp.eq.s32.totalorder %s42, 0
      %p321 = por %p319, %p320
      %s323 = sadd.s32 %s322, 1
      %p326 = scmp.eq.s32.totalorder %s36, 1
      %p327 = scmp.ne.s32.totalorder %s322, %s324
      %p328 = scmp.eq.s32.totalorder %s36, 0
      %p329 = por %p327, %p328
      %p330 = scmp.ne.s32.totalorder %s322, %s324
      %p331 = scmp.eq.s32.totalorder %s41, 1
      %p332 = por %p330, %p331
      %p333 = scmp.ne.s32.totalorder %s324, %s325
      %p334 = scmp.eq.s32.totalorder %s41, 0
      %p335 = por %p333, %p334
      %p336 = scmp.ne.s32.totalorder %s324, %s325
      %p337 = scmp.eq.s32.totalorder %s42, 1
      %p338 = por %p336, %p337
      %p340 = scmp.ne.s32.totalorder %s325, %s339
      %p341 = scmp.eq.s32.totalorder %s42, 0
      %p342 = por %p340, %p341
      %s344 = sadd.s32 %s343, 1
      %p347 = scmp.eq.s32.totalorder %s36, 1
      %p348 = scmp.ne.s32.totalorder %s343, %s345
      %p349 = scmp.eq.s32.totalorder %s36, 0
      %p350 = por %p348, %p349
      %p351 = scmp.ne.s32.totalorder %s343, %s345
      %p352 = scmp.eq.s32.totalorder %s41, 1
      %p353 = por %p351, %p352
      %p354 = scmp.ne.s32.totalorder %s345, %s346
      %p355 = scmp.eq.s32.totalorder %s41, 0
      %p356 = por %p354, %p355
      %p357 = scmp.ne.s32.totalorder %s345, %s346
      %p358 = scmp.eq.s32.totalorder %s42, 1
      %p359 = por %p357, %p358
      %p361 = scmp.ne.s32.totalorder %s346, %s360
      %p362 = scmp.eq.s32.totalorder %s42, 0
      %p363 = por %p361, %p362
      %s364 = ssub.s32 %s36, %s43
      %p365 = scmp.eq.s32.totalorder %s364, 0
      %s367 = sadd.s32 %s366, 1
      %s368 = scalar_select %p365, %s366, %s367
      %p371 = pneg %p365
      %p372 = scmp.eq.s32.totalorder %s36, 1
      %p373 = por %p371, %p372
      %p374 = scmp.ne.s32.totalorder %s366, %s369
      %p375 = scmp.eq.s32.totalorder %s36, 0
      %p376 = por %p374, %p375
      %p377 = scmp.ne.s32.totalorder %s366, %s369
      %p378 = scmp.eq.s32.totalorder %s41, 1
      %p379 = por %p377, %p378
      %p380 = scmp.ne.s32.totalorder %s369, %s370
      %p381 = scmp.eq.s32.totalorder %s41, 0
      %p382 = por %p380, %p381
      %p383 = scmp.ne.s32.totalorder %s369, %s370
      %p384 = scmp.eq.s32.totalorder %s42, 1
      %p385 = por %p383, %p384
      %p387 = scmp.ne.s32.totalorder %s370, %s386
      %p388 = scmp.eq.s32.totalorder %s42, 0
      %p389 = por %p387, %p388
      %s390 = ssub.s32 %s36, %s43
      %p391 = scmp.eq.s32.totalorder %s390, 0
      %s393 = sadd.s32 %s392, 1
      %s394 = scalar_select %p391, %s392, %s393
      %p397 = pneg %p391
      %p398 = scmp.eq.s32.totalorder %s36, 1
      %p399 = por %p397, %p398
      %p400 = scmp.ne.s32.totalorder %s392, %s395
      %p401 = scmp.eq.s32.totalorder %s36, 0
      %p402 = por %p400, %p401
      %p403 = scmp.ne.s32.totalorder %s392, %s395
      %p404 = scmp.eq.s32.totalorder %s41, 1
      %p405 = por %p403, %p404
      %p406 = scmp.ne.s32.totalorder %s395, %s396
      %p407 = scmp.eq.s32.totalorder %s41, 0
      %p408 = por %p406, %p407
      %p409 = scmp.ne.s32.totalorder %s395, %s396
      %p410 = scmp.eq.s32.totalorder %s42, 1
      %p411 = por %p409, %p410
      %p413 = scmp.ne.s32.totalorder %s396, %s412
      %p414 = scmp.eq.s32.totalorder %s42, 0
      %p415 = por %p413, %p414
      %p416 = scmp.le.s32.totalorder 1, %s36
      %p417 = scmp.lt.s32.totalorder %s36, 3
      %p418 = pnand %p416, %p417
      %p419 = pneg %p418
      // Predicated region
      $region9: #{tpu_custom_call.1} parent=5 // pred_check
        _
      $region10: #{tpu_custom_call.1} parent=5 // pred_check_branch
        %421 = sbr.rel (%p418) target = $region12
      $region11: #{tpu_custom_call.1} parent=5 // pred_region
        %s422 = ssub.s32 %s36, 1
        // Predicated region
        $region13: #{tpu_custom_call.1} parent=11 // pred_check
          %p423 = pneg %p83
        $region14: #{tpu_custom_call.1} parent=11 // pred_check_branch
          %425 = sbr.rel (%p423) target = $region16
        $region15: #{tpu_custom_call.1} parent=11 // pred_region
          %s427 = ssub.s32 32, 32
          %428 = vsyncadd [#allocation6], %s427
          %s430 = sshll.u32 [#allocation5], 4
          %s431 = int_to_ptr.vmem [resolvable:$true] %s430
          %433 = dma.hbm_to_vmem [thread:$0]  %s1, 32, %s431, [#allocation6]
        $region16: #{tpu_custom_call.1} parent=11 // pred_fallthru
          _
        // Predicated region
        $region17: #{tpu_custom_call.1} parent=11 // pred_check
          %p434 = pneg %p104
        $region18: #{tpu_custom_call.1} parent=11 // pred_check_branch
          %436 = sbr.rel (%p434) target = $region20
        $region19: #{tpu_custom_call.1} parent=11 // pred_region
          _
        $region20: #{tpu_custom_call.1} parent=11 // pred_fallthru
          _
        // Predicated region
        $region21: #{tpu_custom_call.1} parent=11 // pred_check
          %p437 = pneg %p125
        $region22: #{tpu_custom_call.1} parent=11 // pred_check_branch
          %439 = sbr.rel (%p437) target = $region24
        $region23: #{tpu_custom_call.1} parent=11 // pred_region
          %s441 = ssub.s32 2048, 2048
          %442 = vsyncadd [#allocation6], %s441
          %s443 = sshll.u32 [#allocation7], 4
          %s444 = int_to_ptr.vmem [resolvable:$true] %s443
          %449 = dma.hbm_to_vmem [thread:$0]  %s3, 2048, %s444, [#allocation6], 64, 64, 4
        $region24: #{tpu_custom_call.1} parent=11 // pred_fallthru
          _
        // Predicated region
        $region25: #{tpu_custom_call.1} parent=11 // pred_check
          %p450 = pneg %p146
        $region26: #{tpu_custom_call.1} parent=11 // pred_check_branch
          %452 = sbr.rel (%p450) target = $region28
        $region27: #{tpu_custom_call.1} parent=11 // pred_region
          _
        $region28: #{tpu_custom_call.1} parent=11 // pred_fallthru
          _
        // Predicated region
        $region29: #{tpu_custom_call.1} parent=11 // pred_check
          %p453 = pneg %p167
        $region30: #{tpu_custom_call.1} parent=11 // pred_check_branch
          %455 = sbr.rel (%p453) target = $region32
        $region31: #{tpu_custom_call.1} parent=11 // pred_region
          %s457 = ssub.s32 1024, 1024
          %458 = vsyncadd [#allocation9], %s457
          %s459 = sshll.u32 [#allocation8], 4
          %s460 = int_to_ptr.vmem [resolvable:$true] %s459
          %465 = dma.hbm_to_vmem [thread:$0]  %s5, 1024, %s460, [#allocation9], 64, 64, 4
        $region32: #{tpu_custom_call.1} parent=11 // pred_fallthru
          _
        // Predicated region
        $region33: #{tpu_custom_call.1} parent=11 // pred_check
          %p466 = pneg %p188
        $region34: #{tpu_custom_call.1} parent=11 // pred_check_branch
          %468 = sbr.rel (%p466) target = $region36
        $region35: #{tpu_custom_call.1} parent=11 // pred_region
          _
        $region36: #{tpu_custom_call.1} parent=11 // pred_fallthru
          _
        // Predicated region
        $region37: #{tpu_custom_call.1} parent=11 // pred_check
          %p469 = pneg %p209
        $region38: #{tpu_custom_call.1} parent=11 // pred_check_branch
          %471 = sbr.rel (%p469) target = $region40
        $region39: #{tpu_custom_call.1} parent=11 // pred_region
          %s473 = ssub.s32 1024, 1024
          %474 = vsyncadd [#allocation9], %s473
          %s475 = sshll.u32 [#allocation10], 4
          %s476 = int_to_ptr.vmem [resolvable:$true] %s475
          %481 = dma.hbm_to_vmem [thread:$0]  %s7, 1024, %s476, [#allocation9], 64, 64, 4
        $region40: #{tpu_custom_call.1} parent=11 // pred_fallthru
          _
        // Predicated region
        $region41: #{tpu_custom_call.1} parent=11 // pred_check
          %p482 = pneg %p230
        $region42: #{tpu_custom_call.1} parent=11 // pred_check_branch
          %484 = sbr.rel (%p482) target = $region44
        $region43: #{tpu_custom_call.1} parent=11 // pred_region
          _
        $region44: #{tpu_custom_call.1} parent=11 // pred_fallthru
          _
        // Predicated region
        $region45: #{tpu_custom_call.1} parent=11 // pred_check
          %p485 = pneg %p251
        $region46: #{tpu_custom_call.1} parent=11 // pred_check_branch
          %487 = sbr.rel (%p485) target = $region48
        $region47: #{tpu_custom_call.1} parent=11 // pred_region
          %s489 = ssub.s32 1024, 1024
          %490 = vsyncadd [#allocation12], %s489
          %s491 = sshll.u32 [#allocation11], 4
          %s492 = int_to_ptr.vmem [resolvable:$true] %s491
          %497 = dma.hbm_to_vmem [thread:$0]  %s9, 1024, %s492, [#allocation12], 64, 64, 4
        $region48: #{tpu_custom_call.1} parent=11 // pred_fallthru
          _
        // Predicated region
        $region49: #{tpu_custom_call.1} parent=11 // pred_check
          %p498 = pneg %p272
        $region50: #{tpu_custom_call.1} parent=11 // pred_check_branch
          %500 = sbr.rel (%p498) target = $region52
        $region51: #{tpu_custom_call.1} parent=11 // pred_region
          _
        $region52: #{tpu_custom_call.1} parent=11 // pred_fallthru
          _
        // Predicated region
        $region53: #{tpu_custom_call.1} parent=11 // pred_check
          %p501 = pneg %p293
        $region54: #{tpu_custom_call.1} parent=11 // pred_check_branch
          %503 = sbr.rel (%p501) target = $region56
        $region55: #{tpu_custom_call.1} parent=11 // pred_region
          %s505 = ssub.s32 1024, 1024
          %506 = vsyncadd [#allocation12], %s505
          %s507 = sshll.u32 [#allocation13], 4
          %s508 = int_to_ptr.vmem [resolvable:$true] %s507
          %513 = dma.hbm_to_vmem [thread:$0]  %s11, 1024, %s508, [#allocation12], 64, 64, 4
        $region56: #{tpu_custom_call.1} parent=11 // pred_fallthru
          _
        // Predicated region
        $region57: #{tpu_custom_call.1} parent=11 // pred_check
          %p514 = pneg %p314
        $region58: #{tpu_custom_call.1} parent=11 // pred_check_branch
          %516 = sbr.rel (%p514) target = $region60
        $region59: #{tpu_custom_call.1} parent=11 // pred_region
          _
        $region60: #{tpu_custom_call.1} parent=11 // pred_fallthru
          _
        // Predicated region
        $region61: #{tpu_custom_call.1} parent=11 // pred_check
          %p517 = pneg %p335
        $region62: #{tpu_custom_call.1} parent=11 // pred_check_branch
          %519 = sbr.rel (%p517) target = $region64
        $region63: #{tpu_custom_call.1} parent=11 // pred_region
          %s521 = ssub.s32 2048, 2048
          %522 = vsyncadd [#allocation15], %s521
          %s523 = sshll.u32 [#allocation14], 4
          %s524 = int_to_ptr.vmem [resolvable:$true] %s523
          %529 = dma.hbm_to_vmem [thread:$0]  %s13, 2048, %s524, [#allocation15], 128, 128, 8
        $region64: #{tpu_custom_call.1} parent=11 // pred_fallthru
          _
        // Predicated region
        $region65: #{tpu_custom_call.1} parent=11 // pred_check
          %p530 = pneg %p356
        $region66: #{tpu_custom_call.1} parent=11 // pred_check_branch
          %532 = sbr.rel (%p530) target = $region68
        $region67: #{tpu_custom_call.1} parent=11 // pred_region
          _
        $region68: #{tpu_custom_call.1} parent=11 // pred_fallthru
          _
      $region12: #{tpu_custom_call.1} parent=5 // pred_fallthru
        _
      %p533 = scmp.lt.s32.totalorder %s36, 2
      // Predicated region
      $region69: #{tpu_custom_call.1} parent=5 // pred_check
        %p534 = pneg %p533
      $region70: #{tpu_custom_call.1} parent=5 // pred_check_branch
        %536 = sbr.rel (%p534) target = $region72
      $region71: #{tpu_custom_call.1} parent=5 // pred_region
        // Predicated region
        $region73: #{tpu_custom_call.1} parent=71 // pred_check
          %p537 = pneg %p56
        $region74: #{tpu_custom_call.1} parent=71 // pred_check_branch
          %539 = sbr.rel (%p537) target = $region76
        $region75: #{tpu_custom_call.1} parent=71 // pred_region
          %s540 = sand.u32 %s46, 1
          %s541 = scalar_lea.sflag [#allocation3], %s540
          %s542 = sand.u32 %s46, 1
          %s543 = smul.addr %s542, 64
          %s544 = scalar_lea.vmem [#allocation2], %s543
          %s545 = smul.u32 4, %s36
          %s547 = ssub.s32 1024, 1024
          %548 = vsyncadd %s541, %s547
          %s549 = smul.addr %s545, 2
          %s550 = smul.addr %s549, 128
          %s551 = scalar_lea.hbm %s0, %s550
          %s552 = sshll.u32 %s544, 4
          %s553 = int_to_ptr.vmem [resolvable:$true] %s552
          %558 = dma.hbm_to_vmem [thread:$0]  %s551, 1024, %s553, %s541, 256, 256, 16
        $region76: #{tpu_custom_call.1} parent=71 // pred_fallthru
          _
      $region72: #{tpu_custom_call.1} parent=5 // pred_fallthru
        _
      %p559 = scmp.le.s32.totalorder 1, %s36
      %p560 = scmp.lt.s32.totalorder %s36, 3
      %p561 = pnand %p559, %p560
      %p562 = pneg %p561
      // Predicated region
      $region77: #{tpu_custom_call.1} parent=5 // pred_check
        _
      $region78: #{tpu_custom_call.1} parent=5 // pred_check_branch
        %564 = sbr.rel (%p561) target = $region80
      $region79: #{tpu_custom_call.1} parent=5 // pred_region
        %s565 = ssub.s32 %s36, 1
        %s566 = sand.u32 %s49, 1
        %s567 = scalar_lea.sflag [#allocation3], %s566
        %s568 = sand.u32 %s49, 1
        %s569 = smul.addr %s568, 64
        %s570 = scalar_lea.vmem [#allocation2], %s569
        // Predicated region
        $region81: #{tpu_custom_call.1} parent=79 // pred_check
          %p571 = pneg %p62
        $region82: #{tpu_custom_call.1} parent=79 // pred_check_branch
          %573 = sbr.rel (%p571) target = $region84
        $region83: #{tpu_custom_call.1} parent=79 // pred_region
          %574 = dma.done %s567, 1024
        $region84: #{tpu_custom_call.1} parent=79 // pred_fallthru
          _
        // Predicated region
        $region85: #{tpu_custom_call.1} parent=79 // pred_check
          %p575 = pneg %p83
        $region86: #{tpu_custom_call.1} parent=79 // pred_check_branch
          %577 = sbr.rel (%p575) target = $region88
        $region87: #{tpu_custom_call.1} parent=79 // pred_region
          %578 = dma.done [#allocation6], 32
        $region88: #{tpu_custom_call.1} parent=79 // pred_fallthru
          _
        // Predicated region
        $region89: #{tpu_custom_call.1} parent=79 // pred_check
          %p579 = pneg %p125
        $region90: #{tpu_custom_call.1} parent=79 // pred_check_branch
          %581 = sbr.rel (%p579) target = $region92
        $region91: #{tpu_custom_call.1} parent=79 // pred_region
          %582 = dma.done [#allocation6], 2048
        $region92: #{tpu_custom_call.1} parent=79 // pred_fallthru
          _
        // Predicated region
        $region93: #{tpu_custom_call.1} parent=79 // pred_check
          %p583 = pneg %p167
        $region94: #{tpu_custom_call.1} parent=79 // pred_check_branch
          %585 = sbr.rel (%p583) target = $region96
        $region95: #{tpu_custom_call.1} parent=79 // pred_region
          %586 = dma.done [#allocation9], 1024
        $region96: #{tpu_custom_call.1} parent=79 // pred_fallthru
          _
        // Predicated region
        $region97: #{tpu_custom_call.1} parent=79 // pred_check
          %p587 = pneg %p209
        $region98: #{tpu_custom_call.1} parent=79 // pred_check_branch
          %589 = sbr.rel (%p587) target = $region100
        $region99: #{tpu_custom_call.1} parent=79 // pred_region
          %590 = dma.done [#allocation9], 1024
        $region100: #{tpu_custom_call.1} parent=79 // pred_fallthru
          _
        // Predicated region
        $region101: #{tpu_custom_call.1} parent=79 // pred_check
          %p591 = pneg %p251
        $region102: #{tpu_custom_call.1} parent=79 // pred_check_branch
          %593 = sbr.rel (%p591) target = $region104
        $region103: #{tpu_custom_call.1} parent=79 // pred_region
          %594 = dma.done [#allocation12], 1024
        $region104: #{tpu_custom_call.1} parent=79 // pred_fallthru
          _
        // Predicated region
        $region105: #{tpu_custom_call.1} parent=79 // pred_check
          %p595 = pneg %p293
        $region106: #{tpu_custom_call.1} parent=79 // pred_check_branch
          %597 = sbr.rel (%p595) target = $region108
        $region107: #{tpu_custom_call.1} parent=79 // pred_region
          %598 = dma.done [#allocation12], 1024
        $region108: #{tpu_custom_call.1} parent=79 // pred_fallthru
          _
        // Predicated region
        $region109: #{tpu_custom_call.1} parent=79 // pred_check
          %p599 = pneg %p335
        $region110: #{tpu_custom_call.1} parent=79 // pred_check_branch
          %601 = sbr.rel (%p599) target = $region112
        $region111: #{tpu_custom_call.1} parent=79 // pred_region
          %602 = dma.done [#allocation15], 2048
        $region112: #{tpu_custom_call.1} parent=79 // pred_fallthru
          _
        %s603 = sand.u32 %s49, 1
        %s604 = scalar_lea.sflag [#allocation3], %s603
        %s605 = sand.u32 %s49, 1
        %s606 = smul.addr %s605, 64
        %s607 = scalar_lea.vmem [#allocation2], %s606
        %p608 = pneg %p62
        %p609 = pneg %p59
        %p610 = pneg %p83
        %p611 = pneg %p80
        %p612 = pneg %p104
        %p613 = pneg %p101
        %p614 = pneg %p125
        %p615 = pneg %p122
        %p616 = pneg %p146
        %p617 = pneg %p143
        %p618 = pneg %p167
        %p619 = pneg %p164
        %p620 = pneg %p188
        %p621 = pneg %p185
        %p622 = pneg %p209
        %p623 = pneg %p206
        %p624 = pneg %p230
        %p625 = pneg %p227
        %p626 = pneg %p251
        %p627 = pneg %p248
        %p628 = pneg %p272
        %p629 = pneg %p269
        %p630 = pneg %p293
        %p631 = pneg %p290
        %p632 = pneg %p314
        %p633 = pneg %p311
        %p634 = pneg %p335
        %p635 = pneg %p332
        %p636 = pneg %p356
        %p637 = pneg %p353
        %p638 = pneg %p382
        %p639 = pneg %p379
        %s640 = sand.u32 %s369, 1
        %s641 = scalar_lea.sflag [#allocation4], %s640
        %s642 = sand.u32 %s369, 1
        %s643 = smul.addr %s642, 64
        %s644 = scalar_lea.vmem [#allocation16], %s643
        %p645 = pneg %p408
        %p646 = pneg %p405
        %s647 = sand.u32 %s395, 1
        %s648 = scalar_lea.sflag [#allocation18], %s647
        %s649 = sand.u32 %s395, 1
        %s650 = smul.addr %s649, 32
        %s651 = scalar_lea.vmem [#allocation17], %s650
        %s652 = smul.u32 4, %s41
        %s653 = smul.u32 4, %s41
        %s654 = smul.u32 4, %s41
        %v656 = vld [vmem:[%s570] sm:$0xff]
        %v657 = vld [vmem:[%s570 + $0x8] sm:$0xff]
        %v658 = vld [vmem:[%s570 + $0x10] sm:$0xff]
        %v659 = vld [vmem:[%s570 + $0x18] sm:$0xff]
        %v660 = vld [vmem:[%s570 + $0x20] sm:$0xff]
        %v661 = vld [vmem:[%s570 + $0x28] sm:$0xff]
        %v662 = vld [vmem:[%s570 + $0x30] sm:$0xff]
        %v663 = vld [vmem:[%s570 + $0x38] sm:$0xff]
        %v664 = vld [vmem:[#allocation5] sm:$0x3]
        %v666 = vlaneseq
        %v667 = vshrl.u32 %v666, 7
        %v668 = vsub.s32 0, %v667
        %v669 = vrot.slane %v664, %v668
        %v670 = vlaneseq
        %v671 = vshrl.u32 %v670, 7
        %v672 = vsub.s32 1, %v671
        %v673 = vrot.slane %v664, %v672
        %v676 = vmul.f32 %v656, %v669
        %v677 = vmul.f32 %v657, %v673
        %v678 = vmul.f32 %v658, %v669
        %v679 = vmul.f32 %v659, %v673
        %v680 = vmul.f32 %v660, %v669
        %v681 = vmul.f32 %v661, %v673
        %v682 = vmul.f32 %v662, %v669
        %v683 = vmul.f32 %v663, %v673
        %v684 = vld [vmem:[%s2] sm:$0x3]
        %v686 = vlaneseq
        %v687 = vshrl.u32 %v686, 7
        %v688 = vsub.s32 0, %v687
        %v689 = vrot.slane %v684, %v688
        %v690 = vlaneseq
        %v691 = vshrl.u32 %v690, 7
        %v692 = vsub.s32 1, %v691
        %v693 = vrot.slane %v684, %v692
        %v696 = vadd.f32 %v676, %v689
        %v697 = vadd.f32 %v677, %v693
        %v698 = vadd.f32 %v678, %v689
        %v699 = vadd.f32 %v679, %v693
        %v700 = vadd.f32 %v680, %v689
        %v701 = vadd.f32 %v681, %v693
        %v702 = vadd.f32 %v682, %v689
        %v703 = vadd.f32 %v683, %v693
        %v704 = vpack.c.bf16 %v698, %v696
        %v705 = vpack.c.bf16 %v699, %v697
        %v706 = vpack.c.bf16 %v702, %v700
        %v707 = vpack.c.bf16 %v703, %v701
        %v708 = vld [vmem:[#allocation7] sm:$0xf]
        %v709 = vld [vmem:[#allocation7 + $0x4] sm:$0xf]
        %v710 = vld [vmem:[#allocation7 + $0x8] sm:$0xf]
        %v711 = vld [vmem:[#allocation7 + $0xc] sm:$0xf]
        %v712 = vld [vmem:[#allocation7 + $0x10] sm:$0xf]
        %v713 = vld [vmem:[#allocation7 + $0x14] sm:$0xf]
        %v714 = vld [vmem:[#allocation7 + $0x18] sm:$0xf]
        %v715 = vld [vmem:[#allocation7 + $0x1c] sm:$0xf]
        %v716 = vld [vmem:[#allocation7 + $0x20] sm:$0xf]
        %v717 = vld [vmem:[#allocation7 + $0x24] sm:$0xf]
        %v718 = vld [vmem:[#allocation7 + $0x28] sm:$0xf]
        %v719 = vld [vmem:[#allocation7 + $0x2c] sm:$0xf]
        %v720 = vld [vmem:[#allocation7 + $0x30] sm:$0xf]
        %v721 = vld [vmem:[#allocation7 + $0x34] sm:$0xf]
        %v722 = vld [vmem:[#allocation7 + $0x38] sm:$0xf]
        %v723 = vld [vmem:[#allocation7 + $0x3c] sm:$0xf]
        %v724 = vld [vmem:[#allocation7 + $0x40] sm:$0xf]
        %v725 = vld [vmem:[#allocation7 + $0x44] sm:$0xf]
        %v726 = vld [vmem:[#allocation7 + $0x48] sm:$0xf]
        %v727 = vld [vmem:[#allocation7 + $0x4c] sm:$0xf]
        %v728 = vld [vmem:[#allocation7 + $0x50] sm:$0xf]
        %v729 = vld [vmem:[#allocation7 + $0x54] sm:$0xf]
        %v730 = vld [vmem:[#allocation7 + $0x58] sm:$0xf]
        %v731 = vld [vmem:[#allocation7 + $0x5c] sm:$0xf]
        %v732 = vld [vmem:[#allocation7 + $0x60] sm:$0xf]
        %v733 = vld [vmem:[#allocation7 + $0x64] sm:$0xf]
        %v734 = vld [vmem:[#allocation7 + $0x68] sm:$0xf]
        %v735 = vld [vmem:[#allocation7 + $0x6c] sm:$0xf]
        %v736 = vld [vmem:[#allocation7 + $0x70] sm:$0xf]
        %v737 = vld [vmem:[#allocation7 + $0x74] sm:$0xf]
        %v738 = vld [vmem:[#allocation7 + $0x78] sm:$0xf]
        %v739 = vld [vmem:[#allocation7 + $0x7c] sm:$0xf]
        %v740 = vld [vmem:[%s4] sm:$0x1]
        %v742 = vlaneseq
        %v743 = vshrl.u32 %v742, 7
        %v744 = vsub.s32 0, %v743
        %v745 = vrot.slane %v740, %v744
        %v779 = vunpack.c.l.b16 %v708
        %v780 = vunpack.c.l.b16 %v709
        %v781 = vunpack.c.l.b16 %v710
        %v782 = vunpack.c.l.b16 %v711
        %v783 = vunpack.c.l.b16 %v712
        %v784 = vunpack.c.l.b16 %v713
        %v785 = vunpack.c.l.b16 %v714
        %v786 = vunpack.c.l.b16 %v715
        %v787 = vunpack.c.l.b16 %v716
        %v788 = vunpack.c.l.b16 %v717
        %v789 = vunpack.c.l.b16 %v718
        %v790 = vunpack.c.l.b16 %v719
        %v791 = vunpack.c.l.b16 %v720
        %v792 = vunpack.c.l.b16 %v721
        %v793 = vunpack.c.l.b16 %v722
        %v794 = vunpack.c.l.b16 %v723
        %v795 = vunpack.c.l.b16 %v724
        %v796 = vunpack.c.l.b16 %v725
        %v797 = vunpack.c.l.b16 %v726
        %v798 = vunpack.c.l.b16 %v727
        %v799 = vunpack.c.l.b16 %v728
        %v800 = vunpack.c.l.b16 %v729
        %v801 = vunpack.c.l.b16 %v730
        %v802 = vunpack.c.l.b16 %v731
        %v803 = vunpack.c.l.b16 %v732
        %v804 = vunpack.c.l.b16 %v733
        %v805 = vunpack.c.l.b16 %v734
        %v806 = vunpack.c.l.b16 %v735
        %v807 = vunpack.c.l.b16 %v736
        %v808 = vunpack.c.l.b16 %v737
        %v809 = vunpack.c.l.b16 %v738
        %v810 = vunpack.c.l.b16 %v739
        %v811 = vpack.c.b16 %v780, %v779
        %v812 = vpack.c.b16 %v782, %v781
        %v813 = vpack.c.b16 %v784, %v783
        %v814 = vpack.c.b16 %v786, %v785
        %v815 = vpack.c.b16 %v788, %v787
        %v816 = vpack.c.b16 %v790, %v789
        %v817 = vpack.c.b16 %v792, %v791
        %v818 = vpack.c.b16 %v794, %v793
        %v819 = vpack.c.b16 %v796, %v795
        %v820 = vpack.c.b16 %v798, %v797
        %v821 = vpack.c.b16 %v800, %v799
        %v822 = vpack.c.b16 %v802, %v801
        %v823 = vpack.c.b16 %v804, %v803
        %v824 = vpack.c.b16 %v806, %v805
        %v825 = vpack.c.b16 %v808, %v807
        %v826 = vpack.c.b16 %v810, %v809
        %843 = vmatprep.subr.bf16.mxu0 0
        %844 = vmatpush1.bf16.msra.mxu0 %v818
        %845 = vmatprep.subr.bf16.mxu0 0
        %846 = vmatpush1.bf16.msra.mxu0 %v817
        %847 = vmatprep.subr.bf16.mxu0 0
        %848 = vmatpush1.bf16.msra.mxu0 %v816
        %849 = vmatprep.subr.bf16.mxu0 0
        %850 = vmatpush1.bf16.msra.mxu0 %v815
        %851 = vmatprep.subr.bf16.mxu0 0
        %852 = vmatpush1.bf16.msra.mxu0 %v814
        %853 = vmatprep.subr.bf16.mxu0 0
        %854 = vmatpush1.bf16.msra.mxu0 %v813
        %855 = vmatprep.subr.bf16.mxu0 0
        %856 = vmatpush1.bf16.msra.mxu0 %v812
        %857 = vmatprep.subr.bf16.mxu0 0
        %858 = vmatpush1.bf16.msra.mxu0 %v811
        %859 = vmatprep.subr.bf16.mxu0 0
        %860 = vmatpush2.bf16.msra.mxu0 %v826
        %861 = vmatprep.subr.bf16.mxu0 0
        %862 = vmatpush2.bf16.msra.mxu0 %v825
        %863 = vmatprep.subr.bf16.mxu0 0
        %864 = vmatpush2.bf16.msra.mxu0 %v824
        %865 = vmatprep.subr.bf16.mxu0 0
        %866 = vmatpush2.bf16.msra.mxu0 %v823
        %867 = vmatprep.subr.bf16.mxu0 0
        %868 = vmatpush2.bf16.msra.mxu0 %v822
        %869 = vmatprep.subr.bf16.mxu0 0
        %870 = vmatpush2.bf16.msra.mxu0 %v821
        %871 = vmatprep.subr.bf16.mxu0 0
        %872 = vmatpush2.bf16.msra.mxu0 %v820
        %873 = vmatprep.subr.bf16.mxu0 0
        %874 = vmatpush2.bf16.msra.mxu0 %v819
        %875 = vmatprep.mubr.bf16.mxu0 %v705
        %876 = vmatmul.mubr.bf16.gmra.mxu0 %v704
        %v877 = vpop.f32.mrf.mxu0
        %v878 = vadd.f32 %v745, %v877
        %v879 = vpop.f32.mrf.mxu0
        %v880 = vpop.f32.mrf.mxu0
        %v881 = vadd.f32 %v745, %v880
        %v882 = vpop.f32.mrf.mxu0
        %883 = vmatprep.mubr.bf16.mxu0 %v707
        %884 = vmatmul.mubr.bf16.gmra.mxu0 %v706
        %v885 = vpop.f32.mrf.mxu0
        %v886 = vadd.f32 %v745, %v885
        %v887 = vpop.f32.mrf.mxu0
        %v888 = vpop.f32.mrf.mxu0
        %v889 = vadd.f32 %v745, %v888
        %v890 = vpop.f32.mrf.mxu0
        %891 = vdwg.mxu0
        %v892 = vmax.f32 %v878, 0.0
        %v893 = vmax.f32 %v881, 0.0
        %v894 = vmax.f32 %v886, 0.0
        %v895 = vmax.f32 %v889, 0.0
        %v896 = vpack.c.bf16 %v893, %v892
        %v897 = vpack.c.bf16 %v895, %v894
        %v898 = vld [vmem:[#allocation8] sm:$0xf]
        %v899 = vld [vmem:[#allocation8 + $0x4] sm:$0xf]
        %v900 = vld [vmem:[#allocation8 + $0x8] sm:$0xf]
        %v901 = vld [vmem:[#allocation8 + $0xc] sm:$0xf]
        %v902 = vld [vmem:[#allocation8 + $0x10] sm:$0xf]
        %v903 = vld [vmem:[#allocation8 + $0x14] sm:$0xf]
        %v904 = vld [vmem:[#allocation8 + $0x18] sm:$0xf]
        %v905 = vld [vmem:[#allocation8 + $0x1c] sm:$0xf]
        %v906 = vld [vmem:[#allocation8 + $0x20] sm:$0xf]
        %v907 = vld [vmem:[#allocation8 + $0x24] sm:$0xf]
        %v908 = vld [vmem:[#allocation8 + $0x28] sm:$0xf]
        %v909 = vld [vmem:[#allocation8 + $0x2c] sm:$0xf]
        %v910 = vld [vmem:[#allocation8 + $0x30] sm:$0xf]
        %v911 = vld [vmem:[#allocation8 + $0x34] sm:$0xf]
        %v912 = vld [vmem:[#allocation8 + $0x38] sm:$0xf]
        %v913 = vld [vmem:[#allocation8 + $0x3c] sm:$0xf]
        %v914 = vld [vmem:[%s6] sm:$0x1]
        %v916 = vlaneseq
        %v917 = vshrl.u32 %v916, 7
        %v918 = vsub.s32 0, %v917
        %v919 = vrot.slane %v914, %v918
        %v937 = vunpack.c.l.b16 %v898
        %v938 = vunpack.c.l.b16 %v899
        %v939 = vunpack.c.l.b16 %v900
        %v940 = vunpack.c.l.b16 %v901
        %v941 = vunpack.c.l.b16 %v902
        %v942 = vunpack.c.l.b16 %v903
        %v943 = vunpack.c.l.b16 %v904
        %v944 = vunpack.c.l.b16 %v905
        %v945 = vunpack.c.l.b16 %v906
        %v946 = vunpack.c.l.b16 %v907
        %v947 = vunpack.c.l.b16 %v908
        %v948 = vunpack.c.l.b16 %v909
        %v949 = vunpack.c.l.b16 %v910
        %v950 = vunpack.c.l.b16 %v911
        %v951 = vunpack.c.l.b16 %v912
        %v952 = vunpack.c.l.b16 %v913
        %v953 = vpack.c.b16 %v938, %v937
        %v954 = vpack.c.b16 %v940, %v939
        %v955 = vpack.c.b16 %v942, %v941
        %v956 = vpack.c.b16 %v944, %v943
        %v957 = vpack.c.b16 %v946, %v945
        %v958 = vpack.c.b16 %v948, %v947
        %v959 = vpack.c.b16 %v950, %v949
        %v960 = vpack.c.b16 %v952, %v951
        %969 = vmatprep.subr.bf16.mxu0 0
        %970 = vmatpush1.bf16.msra.mxu0 %v960
        %971 = vmatprep.subr.bf16.mxu0 0
        %972 = vmatpush1.bf16.msra.mxu0 %v959
        %973 = vmatprep.subr.bf16.mxu0 0
        %974 = vmatpush1.bf16.msra.mxu0 %v958
        %975 = vmatprep.subr.bf16.mxu0 0
        %976 = vmatpush1.bf16.msra.mxu0 %v957
        %977 = vmatprep.subr.bf16.mxu0 0
        %978 = vmatpush1.bf16.msra.mxu0 %v956
        %979 = vmatprep.subr.bf16.mxu0 0
        %980 = vmatpush1.bf16.msra.mxu0 %v955
        %981 = vmatprep.subr.bf16.mxu0 0
        %982 = vmatpush1.bf16.msra.mxu0 %v954
        %983 = vmatprep.subr.bf16.mxu0 0
        %984 = vmatpush1.bf16.msra.mxu0 %v953
        %985 = vmatprep.subr.bf16.mxu0 0
        %986 = vmatpush2.bf16.msra.mxu0 0
        %987 = vmatprep.subr.bf16.mxu0 0
        %988 = vmatpush2.bf16.msra.mxu0 0
        %989 = vmatprep.subr.bf16.mxu0 0
        %990 = vmatpush2.bf16.msra.mxu0 0
        %991 = vmatprep.subr.bf16.mxu0 0
        %992 = vmatpush2.bf16.msra.mxu0 0
        %993 = vmatprep.subr.bf16.mxu0 0
        %994 = vmatpush2.bf16.msra.mxu0 0
        %995 = vmatprep.subr.bf16.mxu0 0
        %996 = vmatpush2.bf16.msra.mxu0 0
        %997 = vmatprep.subr.bf16.mxu0 0
        %998 = vmatpush2.bf16.msra.mxu0 0
        %999 = vmatprep.subr.bf16.mxu0 0
        %1000 = vmatpush2.bf16.msra.mxu0 0
        %1001 = vmatprep.mubr.bf16.mxu0 0
        %1002 = vmatmul.mubr.bf16.gmra.mxu0 %v896
        %v1003 = vpop.f32.mrf.mxu0
        %v1004 = vadd.f32 %v919, %v1003
        %v1005 = vpop.f32.mrf.mxu0
        %v1006 = vpop.f32.mrf.mxu0
        %v1007 = vadd.f32 %v919, %v1006
        %v1008 = vpop.f32.mrf.mxu0
        %1009 = vmatprep.mubr.bf16.mxu0 0
        %1010 = vmatmul.mubr.bf16.gmra.mxu0 %v897
        %v1011 = vpop.f32.mrf.mxu0
        %v1012 = vadd.f32 %v919, %v1011
        %v1013 = vpop.f32.mrf.mxu0
        %v1014 = vpop.f32.mrf.mxu0
        %v1015 = vadd.f32 %v919, %v1014
        %v1016 = vpop.f32.mrf.mxu0
        %1017 = vdwg.mxu0
        %v1018 = vmax.f32 %v1004, 0.0
        %v1019 = vmax.f32 %v1007, 0.0
        %v1020 = vmax.f32 %v1012, 0.0
        %v1021 = vmax.f32 %v1015, 0.0
        %v1022 = vpack.c.bf16 %v1019, %v1018
        %v1023 = vpack.c.bf16 %v1021, %v1020
        %v1024 = vld [vmem:[#allocation10] sm:$0xf]
        %v1025 = vld [vmem:[#allocation10 + $0x4] sm:$0xf]
        %v1026 = vld [vmem:[#allocation10 + $0x8] sm:$0xf]
        %v1027 = vld [vmem:[#allocation10 + $0xc] sm:$0xf]
        %v1028 = vld [vmem:[#allocation10 + $0x10] sm:$0xf]
        %v1029 = vld [vmem:[#allocation10 + $0x14] sm:$0xf]
        %v1030 = vld [vmem:[#allocation10 + $0x18] sm:$0xf]
        %v1031 = vld [vmem:[#allocation10 + $0x1c] sm:$0xf]
        %v1032 = vld [vmem:[#allocation10 + $0x20] sm:$0xf]
        %v1033 = vld [vmem:[#allocation10 + $0x24] sm:$0xf]
        %v1034 = vld [vmem:[#allocation10 + $0x28] sm:$0xf]
        %v1035 = vld [vmem:[#allocation10 + $0x2c] sm:$0xf]
        %v1036 = vld [vmem:[#allocation10 + $0x30] sm:$0xf]
        %v1037 = vld [vmem:[#allocation10 + $0x34] sm:$0xf]
        %v1038 = vld [vmem:[#allocation10 + $0x38] sm:$0xf]
        %v1039 = vld [vmem:[#allocation10 + $0x3c] sm:$0xf]
        %v1040 = vld [vmem:[%s8] sm:$0x1]
        %v1042 = vlaneseq
        %v1043 = vshrl.u32 %v1042, 7
        %v1044 = vsub.s32 0, %v1043
        %v1045 = vrot.slane %v1040, %v1044
        %v1063 = vunpack.c.l.b16 %v1024
        %v1064 = vunpack.c.l.b16 %v1025
        %v1065 = vunpack.c.l.b16 %v1026
        %v1066 = vunpack.c.l.b16 %v1027
        %v1067 = vunpack.c.l.b16 %v1028
        %v1068 = vunpack.c.l.b16 %v1029
        %v1069 = vunpack.c.l.b16 %v1030
        %v1070 = vunpack.c.l.b16 %v1031
        %v1071 = vunpack.c.l.b16 %v1032
        %v1072 = vunpack.c.l.b16 %v1033
        %v1073 = vunpack.c.l.b16 %v1034
        %v1074 = vunpack.c.l.b16 %v1035
        %v1075 = vunpack.c.l.b16 %v1036
        %v1076 = vunpack.c.l.b16 %v1037
        %v1077 = vunpack.c.l.b16 %v1038
        %v1078 = vunpack.c.l.b16 %v1039
        %v1079 = vpack.c.b16 %v1064, %v1063
        %v1080 = vpack.c.b16 %v1066, %v1065
        %v1081 = vpack.c.b16 %v1068, %v1067
        %v1082 = vpack.c.b16 %v1070, %v1069
        %v1083 = vpack.c.b16 %v1072, %v1071
        %v1084 = vpack.c.b16 %v1074, %v1073
        %v1085 = vpack.c.b16 %v1076, %v1075
        %v1086 = vpack.c.b16 %v1078, %v1077
        %1095 = vmatprep.subr.bf16.mxu0 0
        %1096 = vmatpush1.bf16.msra.mxu0 %v1086
        %1097 = vmatprep.subr.bf16.mxu0 0
        %1098 = vmatpush1.bf16.msra.mxu0 %v1085
        %1099 = vmatprep.subr.bf16.mxu0 0
        %1100 = vmatpush1.bf16.msra.mxu0 %v1084
        %1101 = vmatprep.subr.bf16.mxu0 0
        %1102 = vmatpush1.bf16.msra.mxu0 %v1083
        %1103 = vmatprep.subr.bf16.mxu0 0
        %1104 = vmatpush1.bf16.msra.mxu0 %v1082
        %1105 = vmatprep.subr.bf16.mxu0 0
        %1106 = vmatpush1.bf16.msra.mxu0 %v1081
        %1107 = vmatprep.subr.bf16.mxu0 0
        %1108 = vmatpush1.bf16.msra.mxu0 %v1080
        %1109 = vmatprep.subr.bf16.mxu0 0
        %1110 = vmatpush1.bf16.msra.mxu0 %v1079
        %1111 = vmatprep.subr.bf16.mxu0 0
        %1112 = vmatpush2.bf16.msra.mxu0 0
        %1113 = vmatprep.subr.bf16.mxu0 0
        %1114 = vmatpush2.bf16.msra.mxu0 0
        %1115 = vmatprep.subr.bf16.mxu0 0
        %1116 = vmatpush2.bf16.msra.mxu0 0
        %1117 = vmatprep.subr.bf16.mxu0 0
        %1118 = vmatpush2.bf16.msra.mxu0 0
        %1119 = vmatprep.subr.bf16.mxu0 0
        %1120 = vmatpush2.bf16.msra.mxu0 0
        %1121 = vmatprep.subr.bf16.mxu0 0
        %1122 = vmatpush2.bf16.msra.mxu0 0
        %1123 = vmatprep.subr.bf16.mxu0 0
        %1124 = vmatpush2.bf16.msra.mxu0 0
        %1125 = vmatprep.subr.bf16.mxu0 0
        %1126 = vmatpush2.bf16.msra.mxu0 0
        %1127 = vmatprep.mubr.bf16.mxu0 0
        %1128 = vmatmul.mubr.bf16.gmra.mxu0 %v1022
        %v1129 = vpop.f32.mrf.mxu0
        %v1130 = vadd.f32 %v1045, %v1129
        %v1131 = vpop.f32.mrf.mxu0
        %v1132 = vpop.f32.mrf.mxu0
        %v1133 = vadd.f32 %v1045, %v1132
        %v1134 = vpop.f32.mrf.mxu0
        %1135 = vmatprep.mubr.bf16.mxu0 0
        %1136 = vmatmul.mubr.bf16.gmra.mxu0 %v1023
        %v1137 = vpop.f32.mrf.mxu0
        %v1138 = vadd.f32 %v1045, %v1137
        %v1139 = vpop.f32.mrf.mxu0
        %v1140 = vpop.f32.mrf.mxu0
        %v1141 = vadd.f32 %v1045, %v1140
        %v1142 = vpop.f32.mrf.mxu0
        %1143 = vdwg.mxu0
        %v1144 = vlaneseq
        %v1145 = vand.u32 %v1144, 127
        %vm1146 = vcmp.ge.s32.totalorder %v1145, 32
        %vm1147 = vcmp.lt.s32.totalorder %v1145, 64
        %vm1148 = vmand %vm1146, %vm1147
        %v1149 = vmul.f32 %v1130, 0.5
        %v1150 = vmul.f32 %v1133, 0.5
        %v1151 = vmul.f32 %v1138, 0.5
        %v1152 = vmul.f32 %v1141, 0.5
        %v1153 = vmul.f32 %v1149, 1.442695
        %v1154 = vpow.pop %v1153
        %v1155 = vmul.f32 %v1150, 1.442695
        %v1156 = vpow.pop %v1155
        %v1157 = vmul.f32 %v1151, 1.442695
        %v1158 = vpow.pop %v1157
        %v1159 = vmul.f32 %v1152, 1.442695
        %v1160 = vpow.pop %v1159
        %v1161 = vsel %vm1148, %v1154, %v1130
        %v1162 = vsel %vm1148, %v1156, %v1133
        %v1163 = vsel %vm1148, %v1158, %v1138
        %v1164 = vsel %vm1148, %v1160, %v1141
        %1165 = vst [vmem:[%s651] sm:$0xff] %v1161
        %1166 = vst [vmem:[%s651 + $0x8] sm:$0xff] %v1162
        %1167 = vst [vmem:[%s651 + $0x10] sm:$0xff] %v1163
        %1168 = vst [vmem:[%s651 + $0x18] sm:$0xff] %v1164
        %v1169 = vpack.c.bf16 %v1162, %v1161
        %v1170 = vpack.c.bf16 %v1164, %v1163
        %v1171 = vld [vmem:[#allocation11] sm:$0xf]
        %v1172 = vld [vmem:[#allocation11 + $0x4] sm:$0xf]
        %v1173 = vld [vmem:[#allocation11 + $0x8] sm:$0xf]
        %v1174 = vld [vmem:[#allocation11 + $0xc] sm:$0xf]
        %v1175 = vld [vmem:[#allocation11 + $0x10] sm:$0xf]
        %v1176 = vld [vmem:[#allocation11 + $0x14] sm:$0xf]
        %v1177 = vld [vmem:[#allocation11 + $0x18] sm:$0xf]
        %v1178 = vld [vmem:[#allocation11 + $0x1c] sm:$0xf]
        %v1179 = vld [vmem:[#allocation11 + $0x20] sm:$0xf]
        %v1180 = vld [vmem:[#allocation11 + $0x24] sm:$0xf]
        %v1181 = vld [vmem:[#allocation11 + $0x28] sm:$0xf]
        %v1182 = vld [vmem:[#allocation11 + $0x2c] sm:$0xf]
        %v1183 = vld [vmem:[#allocation11 + $0x30] sm:$0xf]
        %v1184 = vld [vmem:[#allocation11 + $0x34] sm:$0xf]
        %v1185 = vld [vmem:[#allocation11 + $0x38] sm:$0xf]
        %v1186 = vld [vmem:[#allocation11 + $0x3c] sm:$0xf]
        %v1187 = vld [vmem:[%s10] sm:$0x1]
        %v1189 = vlaneseq
        %v1190 = vshrl.u32 %v1189, 7
        %v1191 = vsub.s32 0, %v1190
        %v1192 = vrot.slane %v1187, %v1191
        %v1210 = vunpack.c.l.b16 %v1171
        %v1211 = vunpack.c.l.b16 %v1172
        %v1212 = vunpack.c.l.b16 %v1173
        %v1213 = vunpack.c.l.b16 %v1174
        %v1214 = vunpack.c.l.b16 %v1175
        %v1215 = vunpack.c.l.b16 %v1176
        %v1216 = vunpack.c.l.b16 %v1177
        %v1217 = vunpack.c.l.b16 %v1178
        %v1218 = vunpack.c.l.b16 %v1179
        %v1219 = vunpack.c.l.b16 %v1180
        %v1220 = vunpack.c.l.b16 %v1181
        %v1221 = vunpack.c.l.b16 %v1182
        %v1222 = vunpack.c.l.b16 %v1183
        %v1223 = vunpack.c.l.b16 %v1184
        %v1224 = vunpack.c.l.b16 %v1185
        %v1225 = vunpack.c.l.b16 %v1186
        %v1226 = vpack.c.b16 %v1211, %v1210
        %v1227 = vpack.c.b16 %v1213, %v1212
        %v1228 = vpack.c.b16 %v1215, %v1214
        %v1229 = vpack.c.b16 %v1217, %v1216
        %v1230 = vpack.c.b16 %v1219, %v1218
        %v1231 = vpack.c.b16 %v1221, %v1220
        %v1232 = vpack.c.b16 %v1223, %v1222
        %v1233 = vpack.c.b16 %v1225, %v1224
        %1242 = vmatprep.subr.bf16.mxu0 0
        %1243 = vmatpush1.bf16.msra.mxu0 %v1233
        %1244 = vmatprep.subr.bf16.mxu0 0
        %1245 = vmatpush1.bf16.msra.mxu0 %v1232
        %1246 = vmatprep.subr.bf16.mxu0 0
        %1247 = vmatpush1.bf16.msra.mxu0 %v1231
        %1248 = vmatprep.subr.bf16.mxu0 0
        %1249 = vmatpush1.bf16.msra.mxu0 %v1230
        %1250 = vmatprep.subr.bf16.mxu0 0
        %1251 = vmatpush1.bf16.msra.mxu0 %v1229
        %1252 = vmatprep.subr.bf16.mxu0 0
        %1253 = vmatpush1.bf16.msra.mxu0 %v1228
        %1254 = vmatprep.subr.bf16.mxu0 0
        %1255 = vmatpush1.bf16.msra.mxu0 %v1227
        %1256 = vmatprep.subr.bf16.mxu0 0
        %1257 = vmatpush1.bf16.msra.mxu0 %v1226
        %1258 = vmatprep.subr.bf16.mxu0 0
        %1259 = vmatpush2.bf16.msra.mxu0 0
        %1260 = vmatprep.subr.bf16.mxu0 0
        %1261 = vmatpush2.bf16.msra.mxu0 0
        %1262 = vmatprep.subr.bf16.mxu0 0
        %1263 = vmatpush2.bf16.msra.mxu0 0
        %1264 = vmatprep.subr.bf16.mxu0 0
        %1265 = vmatpush2.bf16.msra.mxu0 0
        %1266 = vmatprep.subr.bf16.mxu0 0
        %1267 = vmatpush2.bf16.msra.mxu0 0
        %1268 = vmatprep.subr.bf16.mxu0 0
        %1269 = vmatpush2.bf16.msra.mxu0 0
        %1270 = vmatprep.subr.bf16.mxu0 0
        %1271 = vmatpush2.bf16.msra.mxu0 0
        %1272 = vmatprep.subr.bf16.mxu0 0
        %1273 = vmatpush2.bf16.msra.mxu0 0
        %1274 = vmatprep.mubr.bf16.mxu0 0
        %1275 = vmatmul.mubr.bf16.gmra.mxu0 %v1169
        %v1276 = vpop.f32.mrf.mxu0
        %v1277 = vadd.f32 %v1192, %v1276
        %v1278 = vpop.f32.mrf.mxu0
        %v1279 = vpop.f32.mrf.mxu0
        %v1280 = vadd.f32 %v1192, %v1279
        %v1281 = vpop.f32.mrf.mxu0
        %1282 = vmatprep.mubr.bf16.mxu0 0
        %1283 = vmatmul.mubr.bf16.gmra.mxu0 %v1170
        %v1284 = vpop.f32.mrf.mxu0
        %v1285 = vadd.f32 %v1192, %v1284
        %v1286 = vpop.f32.mrf.mxu0
        %v1287 = vpop.f32.mrf.mxu0
        %v1288 = vadd.f32 %v1192, %v1287
        %v1289 = vpop.f32.mrf.mxu0
        %1290 = vdwg.mxu0
        %v1291 = vmax.f32 %v1277, 0.0
        %v1292 = vmax.f32 %v1280, 0.0
        %v1293 = vmax.f32 %v1285, 0.0
        %v1294 = vmax.f32 %v1288, 0.0
        %v1295 = vpack.c.bf16 %v1292, %v1291
        %v1296 = vpack.c.bf16 %v1294, %v1293
        %v1297 = vld [vmem:[#allocation13] sm:$0xf]
        %v1298 = vld [vmem:[#allocation13 + $0x4] sm:$0xf]
        %v1299 = vld [vmem:[#allocation13 + $0x8] sm:$0xf]
        %v1300 = vld [vmem:[#allocation13 + $0xc] sm:$0xf]
        %v1301 = vld [vmem:[#allocation13 + $0x10] sm:$0xf]
        %v1302 = vld [vmem:[#allocation13 + $0x14] sm:$0xf]
        %v1303 = vld [vmem:[#allocation13 + $0x18] sm:$0xf]
        %v1304 = vld [vmem:[#allocation13 + $0x1c] sm:$0xf]
        %v1305 = vld [vmem:[#allocation13 + $0x20] sm:$0xf]
        %v1306 = vld [vmem:[#allocation13 + $0x24] sm:$0xf]
        %v1307 = vld [vmem:[#allocation13 + $0x28] sm:$0xf]
        %v1308 = vld [vmem:[#allocation13 + $0x2c] sm:$0xf]
        %v1309 = vld [vmem:[#allocation13 + $0x30] sm:$0xf]
        %v1310 = vld [vmem:[#allocation13 + $0x34] sm:$0xf]
        %v1311 = vld [vmem:[#allocation13 + $0x38] sm:$0xf]
        %v1312 = vld [vmem:[#allocation13 + $0x3c] sm:$0xf]
        %v1313 = vld [vmem:[%s12] sm:$0x1]
        %v1315 = vlaneseq
        %v1316 = vshrl.u32 %v1315, 7
        %v1317 = vsub.s32 0, %v1316
        %v1318 = vrot.slane %v1313, %v1317
        %v1336 = vunpack.c.l.b16 %v1297
        %v1337 = vunpack.c.l.b16 %v1298
        %v1338 = vunpack.c.l.b16 %v1299
        %v1339 = vunpack.c.l.b16 %v1300
        %v1340 = vunpack.c.l.b16 %v1301
        %v1341 = vunpack.c.l.b16 %v1302
        %v1342 = vunpack.c.l.b16 %v1303
        %v1343 = vunpack.c.l.b16 %v1304
        %v1344 = vunpack.c.l.b16 %v1305
        %v1345 = vunpack.c.l.b16 %v1306
        %v1346 = vunpack.c.l.b16 %v1307
        %v1347 = vunpack.c.l.b16 %v1308
        %v1348 = vunpack.c.l.b16 %v1309
        %v1349 = vunpack.c.l.b16 %v1310
        %v1350 = vunpack.c.l.b16 %v1311
        %v1351 = vunpack.c.l.b16 %v1312
        %v1352 = vpack.c.b16 %v1337, %v1336
        %v1353 = vpack.c.b16 %v1339, %v1338
        %v1354 = vpack.c.b16 %v1341, %v1340
        %v1355 = vpack.c.b16 %v1343, %v1342
        %v1356 = vpack.c.b16 %v1345, %v1344
        %v1357 = vpack.c.b16 %v1347, %v1346
        %v1358 = vpack.c.b16 %v1349, %v1348
        %v1359 = vpack.c.b16 %v1351, %v1350
        %1368 = vmatprep.subr.bf16.mxu0 0
        %1369 = vmatpush1.bf16.msra.mxu0 %v1359
        %1370 = vmatprep.subr.bf16.mxu0 0
        %1371 = vmatpush1.bf16.msra.mxu0 %v1358
        %1372 = vmatprep.subr.bf16.mxu0 0
        %1373 = vmatpush1.bf16.msra.mxu0 %v1357
        %1374 = vmatprep.subr.bf16.mxu0 0
        %1375 = vmatpush1.bf16.msra.mxu0 %v1356
        %1376 = vmatprep.subr.bf16.mxu0 0
        %1377 = vmatpush1.bf16.msra.mxu0 %v1355
        %1378 = vmatprep.subr.bf16.mxu0 0
        %1379 = vmatpush1.bf16.msra.mxu0 %v1354
        %1380 = vmatprep.subr.bf16.mxu0 0
        %1381 = vmatpush1.bf16.msra.mxu0 %v1353
        %1382 = vmatprep.subr.bf16.mxu0 0
        %1383 = vmatpush1.bf16.msra.mxu0 %v1352
        %1384 = vmatprep.subr.bf16.mxu0 0
        %1385 = vmatpush2.bf16.msra.mxu0 0
        %1386 = vmatprep.subr.bf16.mxu0 0
        %1387 = vmatpush2.bf16.msra.mxu0 0
        %1388 = vmatprep.subr.bf16.mxu0 0
        %1389 = vmatpush2.bf16.msra.mxu0 0
        %1390 = vmatprep.subr.bf16.mxu0 0
        %1391 = vmatpush2.bf16.msra.mxu0 0
        %1392 = vmatprep.subr.bf16.mxu0 0
        %1393 = vmatpush2.bf16.msra.mxu0 0
        %1394 = vmatprep.subr.bf16.mxu0 0
        %1395 = vmatpush2.bf16.msra.mxu0 0
        %1396 = vmatprep.subr.bf16.mxu0 0
        %1397 = vmatpush2.bf16.msra.mxu0 0
        %1398 = vmatprep.subr.bf16.mxu0 0
        %1399 = vmatpush2.bf16.msra.mxu0 0
        %1400 = vmatprep.mubr.bf16.mxu0 0
        %1401 = vmatmul.mubr.bf16.gmra.mxu0 %v1295
        %v1402 = vpop.f32.mrf.mxu0
        %v1403 = vadd.f32 %v1318, %v1402
        %v1404 = vpop.f32.mrf.mxu0
        %v1405 = vpop.f32.mrf.mxu0
        %v1406 = vadd.f32 %v1318, %v1405
        %v1407 = vpop.f32.mrf.mxu0
        %1408 = vmatprep.mubr.bf16.mxu0 0
        %1409 = vmatmul.mubr.bf16.gmra.mxu0 %v1296
        %v1410 = vpop.f32.mrf.mxu0
        %v1411 = vadd.f32 %v1318, %v1410
        %v1412 = vpop.f32.mrf.mxu0
        %v1413 = vpop.f32.mrf.mxu0
        %v1414 = vadd.f32 %v1318, %v1413
        %v1415 = vpop.f32.mrf.mxu0
        %1416 = vdwg.mxu0
        %v1417 = vmax.f32 %v1403, 0.0
        %v1418 = vmax.f32 %v1406, 0.0
        %v1419 = vmax.f32 %v1411, 0.0
        %v1420 = vmax.f32 %v1414, 0.0
        %v1421 = vpack.c.bf16 %v1418, %v1417
        %v1422 = vpack.c.bf16 %v1420, %v1419
        %v1423 = vld [vmem:[#allocation14] sm:$0xff]
        %v1424 = vld [vmem:[#allocation14 + $0x8] sm:$0xff]
        %v1425 = vld [vmem:[#allocation14 + $0x10] sm:$0xff]
        %v1426 = vld [vmem:[#allocation14 + $0x18] sm:$0xff]
        %v1427 = vld [vmem:[#allocation14 + $0x20] sm:$0xff]
        %v1428 = vld [vmem:[#allocation14 + $0x28] sm:$0xff]
        %v1429 = vld [vmem:[#allocation14 + $0x30] sm:$0xff]
        %v1430 = vld [vmem:[#allocation14 + $0x38] sm:$0xff]
        %v1431 = vld [vmem:[#allocation14 + $0x40] sm:$0xff]
        %v1432 = vld [vmem:[#allocation14 + $0x48] sm:$0xff]
        %v1433 = vld [vmem:[#allocation14 + $0x50] sm:$0xff]
        %v1434 = vld [vmem:[#allocation14 + $0x58] sm:$0xff]
        %v1435 = vld [vmem:[#allocation14 + $0x60] sm:$0xff]
        %v1436 = vld [vmem:[#allocation14 + $0x68] sm:$0xff]
        %v1437 = vld [vmem:[#allocation14 + $0x70] sm:$0xff]
        %v1438 = vld [vmem:[#allocation14 + $0x78] sm:$0xff]
        %v1439 = vld [vmem:[%s14] sm:$0x3]
        %v1441 = vlaneseq
        %v1442 = vshrl.u32 %v1441, 7
        %v1443 = vsub.s32 0, %v1442
        %v1444 = vrot.slane %v1439, %v1443
        %v1445 = vlaneseq
        %v1446 = vshrl.u32 %v1445, 7
        %v1447 = vsub.s32 1, %v1446
        %v1448 = vrot.slane %v1439, %v1447
        %v1467 = vunpack.c.l.b16 %v1423
        %v1468 = vunpack.c.h.b16 %v1423
        %v1469 = vunpack.c.l.b16 %v1424
        %v1470 = vunpack.c.h.b16 %v1424
        %v1471 = vunpack.c.l.b16 %v1425
        %v1472 = vunpack.c.h.b16 %v1425
        %v1473 = vunpack.c.l.b16 %v1426
        %v1474 = vunpack.c.h.b16 %v1426
        %v1475 = vunpack.c.l.b16 %v1427
        %v1476 = vunpack.c.h.b16 %v1427
        %v1477 = vunpack.c.l.b16 %v1428
        %v1478 = vunpack.c.h.b16 %v1428
        %v1479 = vunpack.c.l.b16 %v1429
        %v1480 = vunpack.c.h.b16 %v1429
        %v1481 = vunpack.c.l.b16 %v1430
        %v1482 = vunpack.c.h.b16 %v1430
        %v1483 = vunpack.c.l.b16 %v1431
        %v1484 = vunpack.c.h.b16 %v1431
        %v1485 = vunpack.c.l.b16 %v1432
        %v1486 = vunpack.c.h.b16 %v1432
        %v1487 = vunpack.c.l.b16 %v1433
        %v1488 = vunpack.c.h.b16 %v1433
        %v1489 = vunpack.c.l.b16 %v1434
        %v1490 = vunpack.c.h.b16 %v1434
        %v1491 = vunpack.c.l.b16 %v1435
        %v1492 = vunpack.c.h.b16 %v1435
        %v1493 = vunpack.c.l.b16 %v1436
        %v1494 = vunpack.c.h.b16 %v1436
        %v1495 = vunpack.c.l.b16 %v1437
        %v1496 = vunpack.c.h.b16 %v1437
        %v1497 = vunpack.c.l.b16 %v1438
        %v1498 = vunpack.c.h.b16 %v1438
        %v1499 = vpack.c.b16 %v1469, %v1467
        %v1500 = vpack.c.b16 %v1470, %v1468
        %v1501 = vpack.c.b16 %v1473, %v1471
        %v1502 = vpack.c.b16 %v1474, %v1472
        %v1503 = vpack.c.b16 %v1477, %v1475
        %v1504 = vpack.c.b16 %v1478, %v1476
        %v1505 = vpack.c.b16 %v1481, %v1479
        %v1506 = vpack.c.b16 %v1482, %v1480
        %v1507 = vpack.c.b16 %v1485, %v1483
        %v1508 = vpack.c.b16 %v1486, %v1484
        %v1509 = vpack.c.b16 %v1489, %v1487
        %v1510 = vpack.c.b16 %v1490, %v1488
        %v1511 = vpack.c.b16 %v1493, %v1491
        %v1512 = vpack.c.b16 %v1494, %v1492
        %v1513 = vpack.c.b16 %v1497, %v1495
        %v1514 = vpack.c.b16 %v1498, %v1496
        %1531 = vmatprep.subr.bf16.mxu0 %v1514
        %1532 = vmatpush1.bf16.msra.mxu0 %v1513
        %1533 = vmatprep.subr.bf16.mxu0 %v1512
        %1534 = vmatpush1.bf16.msra.mxu0 %v1511
        %1535 = vmatprep.subr.bf16.mxu0 %v1510
        %1536 = vmatpush1.bf16.msra.mxu0 %v1509
        %1537 = vmatprep.subr.bf16.mxu0 %v1508
        %1538 = vmatpush1.bf16.msra.mxu0 %v1507
        %1539 = vmatprep.subr.bf16.mxu0 %v1506
        %1540 = vmatpush1.bf16.msra.mxu0 %v1505
        %1541 = vmatprep.subr.bf16.mxu0 %v1504
        %1542 = vmatpush1.bf16.msra.mxu0 %v1503
        %1543 = vmatprep.subr.bf16.mxu0 %v1502
        %1544 = vmatpush1.bf16.msra.mxu0 %v1501
        %1545 = vmatprep.subr.bf16.mxu0 %v1500
        %1546 = vmatpush1.bf16.msra.mxu0 %v1499
        %1547 = vmatprep.subr.bf16.mxu0 0
        %1548 = vmatpush2.bf16.msra.mxu0 0
        %1549 = vmatprep.subr.bf16.mxu0 0
        %1550 = vmatpush2.bf16.msra.mxu0 0
        %1551 = vmatprep.subr.bf16.mxu0 0
        %1552 = vmatpush2.bf16.msra.mxu0 0
        %1553 = vmatprep.subr.bf16.mxu0 0
        %1554 = vmatpush2.bf16.msra.mxu0 0
        %1555 = vmatprep.subr.bf16.mxu0 0
        %1556 = vmatpush2.bf16.msra.mxu0 0
        %1557 = vmatprep.subr.bf16.mxu0 0
        %1558 = vmatpush2.bf16.msra.mxu0 0
        %1559 = vmatprep.subr.bf16.mxu0 0
        %1560 = vmatpush2.bf16.msra.mxu0 0
        %1561 = vmatprep.subr.bf16.mxu0 0
        %1562 = vmatpush2.bf16.msra.mxu0 0
        %1563 = vmatprep.mubr.bf16.mxu0 0
        %1564 = vmatmul.mubr.bf16.gmra.mxu0 %v1421
        %v1565 = vpop.f32.mrf.mxu0
        %v1566 = vadd.f32 %v1444, %v1565
        %v1567 = vpop.f32.mrf.mxu0
        %v1568 = vadd.f32 %v1448, %v1567
        %v1569 = vpop.f32.mrf.mxu0
        %v1570 = vadd.f32 %v1444, %v1569
        %v1571 = vpop.f32.mrf.mxu0
        %v1572 = vadd.f32 %v1448, %v1571
        %1573 = vmatprep.mubr.bf16.mxu0 0
        %1574 = vmatmul.mubr.bf16.gmra.mxu0 %v1422
        %v1575 = vpop.f32.mrf.mxu0
        %v1576 = vadd.f32 %v1444, %v1575
        %v1577 = vpop.f32.mrf.mxu0
        %v1578 = vadd.f32 %v1448, %v1577
        %v1579 = vpop.f32.mrf.mxu0
        %v1580 = vadd.f32 %v1444, %v1579
        %v1581 = vpop.f32.mrf.mxu0
        %v1582 = vadd.f32 %v1448, %v1581
        %1583 = vdwg.mxu0
        %v1584 = vxor.u32 %v1566, 2147483648
        %v1585 = vxor.u32 %v1568, 2147483648
        %v1586 = vxor.u32 %v1570, 2147483648
        %v1587 = vxor.u32 %v1572, 2147483648
        %v1588 = vxor.u32 %v1576, 2147483648
        %v1589 = vxor.u32 %v1578, 2147483648
        %v1590 = vxor.u32 %v1580, 2147483648
        %v1591 = vxor.u32 %v1582, 2147483648
        %v1592 = vmul.f32 %v1584, 1.442695
        %v1593 = vpow.pop %v1592
        %v1594 = vmul.f32 %v1585, 1.442695
        %v1595 = vpow.pop %v1594
        %v1596 = vmul.f32 %v1586, 1.442695
        %v1597 = vpow.pop %v1596
        %v1598 = vmul.f32 %v1587, 1.442695
        %v1599 = vpow.pop %v1598
        %v1600 = vmul.f32 %v1588, 1.442695
        %v1601 = vpow.pop %v1600
        %v1602 = vmul.f32 %v1589, 1.442695
        %v1603 = vpow.pop %v1602
        %v1604 = vmul.f32 %v1590, 1.442695
        %v1605 = vpow.pop %v1604
        %v1606 = vmul.f32 %v1591, 1.442695
        %v1607 = vpow.pop %v1606
        %v1608 = vadd.f32 %v1593, 1.0
        %v1609 = vadd.f32 %v1595, 1.0
        %v1610 = vadd.f32 %v1597, 1.0
        %v1611 = vadd.f32 %v1599, 1.0
        %v1612 = vadd.f32 %v1601, 1.0
        %v1613 = vadd.f32 %v1603, 1.0
        %v1614 = vadd.f32 %v1605, 1.0
        %v1615 = vadd.f32 %v1607, 1.0
        %v1616 = vrcp.pop %v1608
        %v1617 = vmul.f32 1.0, %v1616
        %v1618 = vrcp.pop %v1609
        %v1619 = vmul.f32 1.0, %v1618
        %v1620 = vrcp.pop %v1610
        %v1621 = vmul.f32 1.0, %v1620
        %v1622 = vrcp.pop %v1611
        %v1623 = vmul.f32 1.0, %v1622
        %v1624 = vrcp.pop %v1612
        %v1625 = vmul.f32 1.0, %v1624
        %v1626 = vrcp.pop %v1613
        %v1627 = vmul.f32 1.0, %v1626
        %v1628 = vrcp.pop %v1614
        %v1629 = vmul.f32 1.0, %v1628
        %v1630 = vrcp.pop %v1615
        %v1631 = vmul.f32 1.0, %v1630
        %1632 = vst [vmem:[%s644] sm:$0xff] %v1617
        %1633 = vst [vmem:[%s644 + $0x8] sm:$0xff] %v1619
        %1634 = vst [vmem:[%s644 + $0x10] sm:$0xff] %v1621
        %1635 = vst [vmem:[%s644 + $0x18] sm:$0xff] %v1623
        %1636 = vst [vmem:[%s644 + $0x20] sm:$0xff] %v1625
        %1637 = vst [vmem:[%s644 + $0x28] sm:$0xff] %v1627
        %1638 = vst [vmem:[%s644 + $0x30] sm:$0xff] %v1629
        %1639 = vst [vmem:[%s644 + $0x38] sm:$0xff] %v1631
        %s1640 = sand.u32 %s369, 1
        %s1641 = scalar_lea.sflag [#allocation4], %s1640
        %s1642 = sand.u32 %s369, 1
        %s1643 = smul.addr %s1642, 64
        %s1644 = scalar_lea.vmem [#allocation16], %s1643
        %s1645 = sand.u32 %s395, 1
        %s1646 = scalar_lea.sflag [#allocation18], %s1645
        %s1647 = sand.u32 %s395, 1
        %s1648 = smul.addr %s1647, 32
        %s1649 = scalar_lea.vmem [#allocation17], %s1648
        // Predicated region
        $region113: #{tpu_custom_call.1} parent=79 // pred_check
          %p1650 = pneg %p379
        $region114: #{tpu_custom_call.1} parent=79 // pred_check_branch
          %1652 = sbr.rel (%p1650) target = $region116
        $region115: #{tpu_custom_call.1} parent=79 // pred_region
          %s1653 = smul.u32 4, %s41
          %s1655 = ssub.s32 1024, 1024
          %1656 = vsyncadd %s1641, %s1655
          %s1657 = smul.addr %s1653, 2
          %s1658 = smul.addr %s1657, 128
          %s1659 = scalar_lea.hbm %s15, %s1658
          %s1660 = sshll.u32 %s1644, 4
          %s1661 = int_to_ptr.vmem [resolvable:$true] %s1660
          %1666 = dma.vmem_to_hbm [thread:$0]  %s1661, 1024, %s1659, %s1641, 256, 256, 16
        $region116: #{tpu_custom_call.1} parent=79 // pred_fallthru
          _
        // Predicated region
        $region117: #{tpu_custom_call.1} parent=79 // pred_check
          %p1667 = pneg %p405
        $region118: #{tpu_custom_call.1} parent=79 // pred_check_branch
          %1669 = sbr.rel (%p1667) target = $region120
        $region119: #{tpu_custom_call.1} parent=79 // pred_region
          %s1670 = smul.u32 4, %s41
          %s1672 = ssub.s32 512, 512
          %1673 = vsyncadd %s1646, %s1672
          %s1674 = smul.addr %s1670, 128
          %s1675 = scalar_lea.hbm %s16, %s1674
          %s1676 = sshll.u32 %s1649, 4
          %s1677 = int_to_ptr.vmem [resolvable:$true] %s1676
          %1682 = dma.vmem_to_hbm [thread:$0]  %s1677, 512, %s1675, %s1646, 128, 128, 8
        $region120: #{tpu_custom_call.1} parent=79 // pred_fallthru
          _
      $region80: #{tpu_custom_call.1} parent=5 // pred_fallthru
        _
      %p1683 = scmp.le.s32.totalorder 2, %s36
      // Predicated region
      $region121: #{tpu_custom_call.1} parent=5 // pred_check
        %p1684 = pneg %p1683
      $region122: #{tpu_custom_call.1} parent=5 // pred_check_branch
        %1686 = sbr.rel (%p1684) target = $region124
      $region123: #{tpu_custom_call.1} parent=5 // pred_region
        %s1687 = ssub.s32 %s36, 2
        // Predicated region
        $region125: #{tpu_custom_call.1} parent=123 // pred_check
          %p1688 = pneg %p385
        $region126: #{tpu_custom_call.1} parent=123 // pred_check_branch
          %1690 = sbr.rel (%p1688) target = $region128
        $region127: #{tpu_custom_call.1} parent=123 // pred_region
          %s1691 = sand.u32 %s370, 1
          %s1692 = scalar_lea.sflag [#allocation4], %s1691
          %s1693 = sand.u32 %s370, 1
          %s1694 = smul.addr %s1693, 64
          %s1695 = scalar_lea.vmem [#allocation16], %s1694
          %1696 = dma.done %s1692, 1024
        $region128: #{tpu_custom_call.1} parent=123 // pred_fallthru
          _
        // Predicated region
        $region129: #{tpu_custom_call.1} parent=123 // pred_check
          %p1697 = pneg %p411
        $region130: #{tpu_custom_call.1} parent=123 // pred_check_branch
          %1699 = sbr.rel (%p1697) target = $region132
        $region131: #{tpu_custom_call.1} parent=123 // pred_region
          %s1700 = sand.u32 %s396, 1
          %s1701 = scalar_lea.sflag [#allocation18], %s1700
          %s1702 = sand.u32 %s396, 1
          %s1703 = smul.addr %s1702, 32
          %s1704 = scalar_lea.vmem [#allocation17], %s1703
          %1705 = dma.done %s1701, 512
        $region132: #{tpu_custom_call.1} parent=123 // pred_fallthru
          _
      $region124: #{tpu_custom_call.1} parent=5 // pred_fallthru
        _
    $region6: #{tpu_custom_call.1} parent=1 // loop_footer
      %s40 = sadd.s32 1, %s36
    $region7: #{tpu_custom_call.1} parent=1 // loop_footer_branch
      %35 = sbr.rel target = $region3
    $region8: #{tpu_custom_call.1} parent=1 // loop_exit
      _
    %1706 = vsyncpa [#allocation3], 1
    %s1707 = scalar_lea.sflag [#allocation3], 1
    %1708 = vsyncpa %s1707, 1
    %1709 = vsyncpa [#allocation6], 1
    %1710 = vsyncpa [#allocation9], 1
    %1711 = vsyncpa [#allocation12], 1
    %1712 = vsyncpa [#allocation15], 1
    %1713 = vsyncpa [#allocation4], 1
    %s1714 = scalar_lea.sflag [#allocation4], 1
    %1715 = vsyncpa %s1714, 1
    %1716 = vsyncpa [#allocation18], 1
    %s1717 = scalar_lea.sflag [#allocation18], 1
    %1718 = vsyncpa %s1717, 1

</llo_original>
